<compile_context>
chip_gen: v7x
topology: tpu7x:2x2x1
jax: 0.10.0
libtpu: 0.0.40
codegen_flags: <defaults>
</compile_context>

<pallas_src>
import functools

import jax
import jax.numpy as jnp
from jax.experimental import pallas as pl
from jax.experimental.pallas import tpu as pltpu


# ----------------------------------------------------------------------------- helpers

def _mxu_dot(a, b):
    """Matmul on the MXU with bf16 inputs and f32 accumulation."""
    return jnp.dot(a.astype(jnp.bfloat16), b.astype(jnp.bfloat16),
                   preferred_element_type=jnp.float32)


def _masked_softmax(scores, key_mask):
    # scores: (N, N) f32, key_mask: (1, N) broadcast over query rows; all math in f32.
    scores = jnp.where(key_mask > 0.0, scores, -1e9)
    m = jnp.max(scores, axis=-1, keepdims=True)
    e = jnp.exp(scores - m)
    inv = pl.reciprocal(jnp.sum(e, axis=-1, keepdims=True), approx=True)
    return e * inv


# ----------------------------------------------------------------------------- kernels

def _encoder_kernel(x_ref, adj_ref, mask_ref, dist_ref,
                    wg_ref, bg_ref, wq_ref, wk_ref, wv_ref, wo_ref,
                    out_ref, *, n_heads):
    """Fused GCN -> masked multi-head self-attention (+dist bias) -> proj + residual.

    One grid step per (stacked) batch element; all heads handled in-register.
    """
    D = wg_ref.shape[0]
    x = x_ref[0]                                    # (N, D)
    adj = adj_ref[0]                                # (N, N)
    key_mask = mask_ref[0]                          # (1, N)
    dist = dist_ref[0]                              # (N, N) structural bias

    # GCN: ReLU(adj @ (x @ Wg) + bg)
    xw = _mxu_dot(x, wg_ref[...])                   # (N, D)
    h = jnp.maximum(_mxu_dot(adj, xw) + bg_ref[...], 0.0)          # (N, D) f32
    # TODO(synk): padded rows of h carry ReLU(b_gcn) exactly as in the original version;
    # re-mask here if the reference model zeroes padded node features after the GCN.

    # Q/K/V for ALL heads with lane-dense (N, D) x (D, H*D) matmuls.
    # (softmax 1/sqrt(D) scale is pre-folded into Wq on the host.)
    q = _mxu_dot(h, wq_ref[...])                    # (N, H*D)
    k = _mxu_dot(h, wk_ref[...])                    # (N, H*D)
    v = _mxu_dot(h, wv_ref[...])                    # (N, H*D)
    wo = wo_ref[...]                                # (H*D, D), loaded once

    # Per-head attention + fused output projection: cat @ Wo == sum_h head_h @ Wo_h.
    out = h                                         # residual
    for hd in range(n_heads):                       # small static unroll (H = 4)
        lo = hd * D
        qh = q[:, lo:lo + D]
        kh = k[:, lo:lo + D]
        vh = v[:, lo:lo + D]
        scores = _mxu_dot(qh, kh.T) + dist          # (N, N), f32
        attn = _masked_softmax(scores, key_mask)
        head = _mxu_dot(attn, vh)                   # (N, D)
        out = out + _mxu_dot(head, wo[lo:lo + D, :])
    out_ref[0] = out


def _cross_kernel(e0_ref, e1_ref, m0_ref, m1_ref, wq_ref, wk_ref,
                  sim1_ref, sim2_ref, *, n_heads):
    """Cross-attention similarity maps for all heads and both directions, per batch."""
    D = e0_ref.shape[-1]
    e0 = e0_ref[0]                                  # (N, D)
    e1 = e1_ref[0]
    m0 = m0_ref[0]                                  # (1, N) key mask of G0
    m1 = m1_ref[0]
    wq = wq_ref[...]                                # (D, H*D), scale pre-folded
    wk = wk_ref[...]

    q0 = _mxu_dot(e0, wq)                           # (N, H*D)
    k0 = _mxu_dot(e0, wk)
    q1 = _mxu_dot(e1, wq)
    k1 = _mxu_dot(e1, wk)

    for hd in range(n_heads):
        lo = hd * D
        q0h = q0[:, lo:lo + D]
        k0h = k0[:, lo:lo + D]
        q1h = q1[:, lo:lo + D]
        k1h = k1[:, lo:lo + D]
        sim1_ref[0, hd] = _masked_softmax(_mxu_dot(q0h, k1h.T), m1)   # G0 queries G1
        sim2_ref[0, hd] = _masked_softmax(_mxu_dot(q1h, k0h.T), m0)   # G1 queries G0


# ----------------------------------------------------------------------------- wrappers

def encoder_forward(x, adj, mask3, dist, wg, bg, wq, wk, wv, wo, n_heads):
    B, N, D = x.shape
    HD = wq.shape[1]
    kernel = functools.partial(_encoder_kernel, n_heads=n_heads)
    return pl.pallas_call(
        kernel,
        out_shape=jax.ShapeDtypeStruct((B, N, D), jnp.float32),
        grid=(B,),
        in_specs=[
            pl.BlockSpec((1, N, D), lambda b: (b, 0, 0)),
            pl.BlockSpec((1, N, N), lambda b: (b, 0, 0)),
            pl.BlockSpec((1, 1, N), lambda b: (b, 0, 0)),
            pl.BlockSpec((1, N, N), lambda b: (b, 0, 0)),
            # grid-resident weights: block index never changes -> fetched once
            pl.BlockSpec((D, D), lambda b: (0, 0)),
            pl.BlockSpec((1, D), lambda b: (0, 0)),
            pl.BlockSpec((D, HD), lambda b: (0, 0)),
            pl.BlockSpec((D, HD), lambda b: (0, 0)),
            pl.BlockSpec((D, HD), lambda b: (0, 0)),
            pl.BlockSpec((HD, D), lambda b: (0, 0)),
        ],
        out_specs=pl.BlockSpec((1, N, D), lambda b: (b, 0, 0)),
        compiler_params=pltpu.CompilerParams(dimension_semantics=("parallel",)),
    )(x, adj, mask3, dist, wg, bg, wq, wk, wv, wo)


def cross_forward(emb_stacked, mask_stacked, wq, wk, n_heads, batch):
    two_b, N, D = emb_stacked.shape
    B = batch
    HD = wq.shape[1]
    kernel = functools.partial(_cross_kernel, n_heads=n_heads)
    return pl.pallas_call(
        kernel,
        out_shape=(jax.ShapeDtypeStruct((B, n_heads, N, N), jnp.float32),
                   jax.ShapeDtypeStruct((B, n_heads, N, N), jnp.float32)),
        grid=(B,),
        in_specs=[
            pl.BlockSpec((1, N, D), lambda b: (b, 0, 0)),        # e0 = emb[b]       (G1)
            pl.BlockSpec((1, N, D), lambda b: (b + B, 0, 0)),    # e1 = emb[b + B]   (G2)
            pl.BlockSpec((1, 1, N), lambda b: (b, 0, 0)),
            pl.BlockSpec((1, 1, N), lambda b: (b + B, 0, 0)),
            pl.BlockSpec((D, HD), lambda b: (0, 0)),             # grid-resident
            pl.BlockSpec((D, HD), lambda b: (0, 0)),
        ],
        out_specs=(pl.BlockSpec((1, n_heads, N, N), lambda b: (b, 0, 0, 0)),
                   pl.BlockSpec((1, n_heads, N, N), lambda b: (b, 0, 0, 0))),
        compiler_params=pltpu.CompilerParams(dimension_semantics=("parallel",)),
    )(emb_stacked, emb_stacked, mask_stacked, mask_stacked, wq, wk)


# ----------------------------------------------------------------------------- model

class TransformerEncoderPallas:
    """Pallas implementation of SNA-GSL TransformerEncoder (share_qk=True, msa_bias=False)."""

    def __init__(self, key, embedding_size, n_heads):
        D, H = embedding_size, n_heads
        self.D, self.H = D, H
        scale = 1.0 / (D ** 0.5)
        ks = jax.random.split(key, 6)
        s = 0.1
        # GCN layer of the GCNTransformerEncoder
        self.w_gcn = s * jax.random.normal(ks[0], (D, D), jnp.float32)
        self.b_gcn = s * jax.random.normal(ks[1], (1, D), jnp.float32)
        # Shared Q/K projections Linear(D, D*H, bias=False), stored lane-dense as (D, H*D).
        # The softmax 1/sqrt(D) scale is folded into Wq once here; since Q is shared between
        # the self- and cross-attention, this is exactly equivalent to scaling the scores.
        self.wq = (s * jax.random.normal(ks[2], (D, H * D), jnp.float32)) * scale
        self.wk = s * jax.random.normal(ks[3], (D, H * D), jnp.float32)
        # V and output projection of the self-attention block
        self.wv = s * jax.random.normal(ks[4], (D, H * D), jnp.float32)
        self.wo = s * jax.random.normal(ks[5], (H * D, D), jnp.float32)

    # --- GCNTransformerEncoder applied to a (possibly stacked) batch of graphs.
    def embedding_learning(self, x, adj, mask, dist):
        B, N, _ = x.shape
        mask3 = mask.reshape(B, 1, N)
        return encoder_forward(x, adj, mask3, dist, self.w_gcn, self.b_gcn,
                               self.wq, self.wk, self.wv, self.wo, self.H)

    def __call__(self, G1, G2):
        B, N, _ = G1["x"].shape
        # Stack the two graphs along the batch axis: ONE fused pallas_call covers both
        # embedding_learning passes (grid=(2B,), parallel -> shards across v7x's 2 cores),
        # and the cross-attention kernel reads e0/e1 straight out of the stacked result.
        x = jnp.concatenate([G1["x"], G2["x"]], axis=0)
        adj = jnp.concatenate([G1["adj"], G2["adj"]], axis=0)
        dist = jnp.concatenate([G1["dist"], G2["dist"]], axis=0)
        mask3 = jnp.concatenate([G1["mask"], G2["mask"]], axis=0).reshape(2 * B, 1, N)

        emb = self_emb = encoder_forward(x, adj, mask3, dist, self.w_gcn, self.b_gcn,
                                         self.wq, self.wk, self.wv, self.wo, self.H)
        del self_emb
        sim_mat1, sim_mat2 = cross_forward(emb, mask3, self.wq, self.wk, self.H, B)
        return sim_mat1, sim_mat2


# ----------------------------------------------------------------------------- main

def _make_graph(key, B, N, D, n_valid):
    kx, ka, kd = jax.random.split(key, 3)
    x = jax.random.normal(kx, (B, N, D), jnp.float32)
    adj = (jax.random.uniform(ka, (B, N, N)) > 0.5).astype(jnp.float32)
    adj = jnp.maximum(adj, jnp.transpose(adj, (0, 2, 1)))                 # symmetric
    adj = adj + jnp.eye(N, dtype=jnp.float32)[None]                       # self-loops
    mask = (jnp.arange(N)[None, :] < jnp.asarray(n_valid)[:, None]).astype(jnp.float32)
    dist = jax.random.uniform(kd, (B, N, N), jnp.float32)                 # distance bias
    # zero features / adjacency / dist on padded nodes
    x = x * mask[:, :, None]
    adj = adj * mask[:, :, None] * mask[:, None, :]
    dist = dist * mask[:, :, None] * mask[:, None, :]
    return {"x": x, "adj": adj, "mask": mask, "dist": dist}


if __name__ == "__main__":
    B, N, D, H = 2, 8, 32, 4
    root = jax.random.PRNGKey(0)
    k_model, k_g1, k_g2 = jax.random.split(root, 3)

    model = TransformerEncoderPallas(k_model, embedding_size=D, n_heads=H)
    G1 = _make_graph(k_g1, B, N, D, n_valid=[8, 6])
    G2 = _make_graph(k_g2, B, N, D, n_valid=[7, 8])

    sim1, sim2 = model(G1, G2)
    jax.block_until_ready((sim1, sim2))

    assert sim1.shape == (B, H, N, N) and sim2.shape == (B, H, N, N)
    assert bool(jnp.all(jnp.isfinite(sim1))) and bool(jnp.all(jnp.isfinite(sim2)))
    print("KERNEL_OK")
</pallas_src>

<mosaic_0001>
module attributes {stable_mosaic.version = 11 : i64} {
  func.func @_encoder_kernel(%arg0: i32, %arg1: memref<1x8x32xf32, #tpu.memory_space<vmem>>, %arg2: memref<1x8x8xf32, #tpu.memory_space<vmem>>, %arg3: memref<1x1x8xf32, #tpu.memory_space<vmem>>, %arg4: memref<1x8x8xf32, #tpu.memory_space<vmem>>, %arg5: memref<32x32xf32, #tpu.memory_space<vmem>>, %arg6: memref<1x32xf32, #tpu.memory_space<vmem>>, %arg7: memref<32x128xf32, #tpu.memory_space<vmem>>, %arg8: memref<32x128xf32, #tpu.memory_space<vmem>>, %arg9: memref<32x128xf32, #tpu.memory_space<vmem>>, %arg10: memref<128x32xf32, #tpu.memory_space<vmem>>, %arg11: memref<1x8x32xf32, #tpu.memory_space<vmem>>) attributes {dimension_semantics = [#tpu.dimension_semantics<parallel>], iteration_bounds = array<i64: 4>, scalar_prefetch = 0 : i64, scratch_operands = 0 : i64, tpu.core_type = #tpu.core_type<tc>, window_params = [{transform_indices = @transform_0, window_bounds = array<i64: 1, 8, 32>}, {transform_indices = @transform_1, window_bounds = array<i64: 1, 8, 8>}, {transform_indices = @transform_2, window_bounds = array<i64: 1, 1, 8>}, {transform_indices = @transform_3, window_bounds = array<i64: 1, 8, 8>}, {pipeline_mode = #tpu.pipeline_mode<synchronous>, transform_indices = @transform_4, window_bounds = array<i64: 32, 32>}, {pipeline_mode = #tpu.pipeline_mode<synchronous>, transform_indices = @transform_5, window_bounds = array<i64: 1, 32>}, {pipeline_mode = #tpu.pipeline_mode<synchronous>, transform_indices = @transform_6, window_bounds = array<i64: 32, 128>}, {pipeline_mode = #tpu.pipeline_mode<synchronous>, transform_indices = @transform_7, window_bounds = array<i64: 32, 128>}, {pipeline_mode = #tpu.pipeline_mode<synchronous>, transform_indices = @transform_8, window_bounds = array<i64: 32, 128>}, {pipeline_mode = #tpu.pipeline_mode<synchronous>, transform_indices = @transform_9, window_bounds = array<i64: 128, 32>}, {transform_indices = @transform_10, window_bounds = array<i64: 1, 8, 32>}]} {
    %c0 = arith.constant 0 : index
    %c0_0 = arith.constant 0 : index
    %c0_1 = arith.constant 0 : index
    %0 = vector.load %arg1[%c0, %c0_0, %c0_1] : memref<1x8x32xf32, #tpu.memory_space<vmem>>, vector<1x8x32xf32>
    %1 = vector.shape_cast %0 : vector<1x8x32xf32> to vector<8x32xf32>
    %c0_2 = arith.constant 0 : index
    %c0_3 = arith.constant 0 : index
    %c0_4 = arith.constant 0 : index
    %2 = vector.load %arg2[%c0_2, %c0_3, %c0_4] : memref<1x8x8xf32, #tpu.memory_space<vmem>>, vector<1x8x8xf32>
    %3 = vector.shape_cast %2 : vector<1x8x8xf32> to vector<8x8xf32>
    %c0_5 = arith.constant 0 : index
    %c0_6 = arith.constant 0 : index
    %c0_7 = arith.constant 0 : index
    %4 = vector.load %arg3[%c0_5, %c0_6, %c0_7] : memref<1x1x8xf32, #tpu.memory_space<vmem>>, vector<1x1x8xf32>
    %5 = vector.shape_cast %4 : vector<1x1x8xf32> to vector<1x8xf32>
    %c0_8 = arith.constant 0 : index
    %c0_9 = arith.constant 0 : index
    %c0_10 = arith.constant 0 : index
    %6 = vector.load %arg4[%c0_8, %c0_9, %c0_10] : memref<1x8x8xf32, #tpu.memory_space<vmem>>, vector<1x8x8xf32>
    %7 = vector.shape_cast %6 : vector<1x8x8xf32> to vector<8x8xf32>
    %c0_11 = arith.constant 0 : index
    %c0_12 = arith.constant 0 : index
    %8 = vector.load %arg5[%c0_11, %c0_12] : memref<32x32xf32, #tpu.memory_space<vmem>>, vector<32x32xf32>
    %9 = arith.truncf %1 : vector<8x32xf32> to vector<8x32xbf16>
    %10 = arith.truncf %8 : vector<32x32xf32> to vector<32x32xbf16>
    %cst = arith.constant dense<0.000000e+00> : vector<8x32xf32>
    %11 = tpu.matmul %9, %10, %cst {dimension_numbers = #tpu.dot_dimension_numbers<[1], [0], [0], [1], [0, 0, 1, 1], [], []>} : vector<8x32xbf16>, vector<32x32xbf16>, vector<8x32xf32> -> vector<8x32xf32>
    %12 = arith.truncf %3 : vector<8x8xf32> to vector<8x8xbf16>
    %13 = arith.truncf %11 : vector<8x32xf32> to vector<8x32xbf16>
    %cst_13 = arith.constant dense<0.000000e+00> : vector<8x32xf32>
    %14 = tpu.matmul %12, %13, %cst_13 {dimension_numbers = #tpu.dot_dimension_numbers<[1], [0], [0], [1], [0, 0, 1, 1], [], []>} : vector<8x8xbf16>, vector<8x32xbf16>, vector<8x32xf32> -> vector<8x32xf32>
    %c0_14 = arith.constant 0 : index
    %c0_15 = arith.constant 0 : index
    %15 = vector.load %arg6[%c0_14, %c0_15] : memref<1x32xf32, #tpu.memory_space<vmem>>, vector<1x32xf32>
    %16 = vector.broadcast %15 : vector<1x32xf32> to vector<8x32xf32>
    %17 = arith.addf %14, %16 : vector<8x32xf32>
    %cst_16 = arith.constant 0.000000e+00 : f32
    %18 = vector.broadcast %cst_16 : f32 to vector<8x32xf32>
    %19 = arith.maximumf %17, %18 : vector<8x32xf32>
    %c0_17 = arith.constant 0 : index
    %c0_18 = arith.constant 0 : index
    %20 = vector.load %arg7[%c0_17, %c0_18] : memref<32x128xf32, #tpu.memory_space<vmem>>, vector<32x128xf32>
    %21 = arith.truncf %19 : vector<8x32xf32> to vector<8x32xbf16>
    %22 = arith.truncf %20 : vector<32x128xf32> to vector<32x128xbf16>
    %cst_19 = arith.constant dense<0.000000e+00> : vector<8x128xf32>
    %23 = tpu.matmul %21, %22, %cst_19 {dimension_numbers = #tpu.dot_dimension_numbers<[1], [0], [0], [1], [0, 0, 1, 1], [], []>} : vector<8x32xbf16>, vector<32x128xbf16>, vector<8x128xf32> -> vector<8x128xf32>
    %c0_20 = arith.constant 0 : index
    %c0_21 = arith.constant 0 : index
    %24 = vector.load %arg8[%c0_20, %c0_21] : memref<32x128xf32, #tpu.memory_space<vmem>>, vector<32x128xf32>
    %25 = arith.truncf %19 : vector<8x32xf32> to vector<8x32xbf16>
    %26 = arith.truncf %24 : vector<32x128xf32> to vector<32x128xbf16>
    %cst_22 = arith.constant dense<0.000000e+00> : vector<8x128xf32>
    %27 = tpu.matmul %25, %26, %cst_22 {dimension_numbers = #tpu.dot_dimension_numbers<[1], [0], [0], [1], [0, 0, 1, 1], [], []>} : vector<8x32xbf16>, vector<32x128xbf16>, vector<8x128xf32> -> vector<8x128xf32>
    %c0_23 = arith.constant 0 : index
    %c0_24 = arith.constant 0 : index
    %28 = vector.load %arg9[%c0_23, %c0_24] : memref<32x128xf32, #tpu.memory_space<vmem>>, vector<32x128xf32>
    %29 = arith.truncf %19 : vector<8x32xf32> to vector<8x32xbf16>
    %30 = arith.truncf %28 : vector<32x128xf32> to vector<32x128xbf16>
    %cst_25 = arith.constant dense<0.000000e+00> : vector<8x128xf32>
    %31 = tpu.matmul %29, %30, %cst_25 {dimension_numbers = #tpu.dot_dimension_numbers<[1], [0], [0], [1], [0, 0, 1, 1], [], []>} : vector<8x32xbf16>, vector<32x128xbf16>, vector<8x128xf32> -> vector<8x128xf32>
    %c0_26 = arith.constant 0 : index
    %c0_27 = arith.constant 0 : index
    %32 = vector.load %arg10[%c0_26, %c0_27] : memref<128x32xf32, #tpu.memory_space<vmem>>, vector<128x32xf32>
    %33 = vector.extract_strided_slice %23 {offsets = [0, 0], sizes = [8, 32], strides = [1, 1]} : vector<8x128xf32> to vector<8x32xf32>
    %34 = vector.extract_strided_slice %27 {offsets = [0, 0], sizes = [8, 32], strides = [1, 1]} : vector<8x128xf32> to vector<8x32xf32>
    %35 = vector.extract_strided_slice %31 {offsets = [0, 0], sizes = [8, 32], strides = [1, 1]} : vector<8x128xf32> to vector<8x32xf32>
    %36 = tpu.transpose %34, [1, 0] : vector<8x32xf32> -> vector<32x8xf32>
    %37 = arith.truncf %33 : vector<8x32xf32> to vector<8x32xbf16>
    %38 = arith.truncf %36 : vector<32x8xf32> to vector<32x8xbf16>
    %cst_28 = arith.constant dense<0.000000e+00> : vector<8x8xf32>
    %39 = tpu.matmul %37, %38, %cst_28 {dimension_numbers = #tpu.dot_dimension_numbers<[1], [0], [0], [1], [0, 0, 1, 1], [], []>} : vector<8x32xbf16>, vector<32x8xbf16>, vector<8x8xf32> -> vector<8x8xf32>
    %40 = arith.addf %39, %7 : vector<8x8xf32>
    %cst_29 = arith.constant 0.000000e+00 : f32
    %41 = vector.broadcast %cst_29 : f32 to vector<1x8xf32>
    %42 = arith.cmpf ogt, %5, %41 : vector<1x8xf32>
    %cst_30 = arith.constant -1.000000e+09 : f32
    %43 = vector.shape_cast %42 : vector<1x8xi1> to vector<1x8xi1>
    %44 = vector.broadcast %43 : vector<1x8xi1> to vector<8x8xi1>
    %45 = vector.broadcast %cst_30 : f32 to vector<8x8xf32>
    %46 = arith.select %44, %40, %45 : vector<8x8xi1>, vector<8x8xf32>
    %cst_31 = arith.constant dense<0xFF800000> : vector<8xf32>
    %47 = vector.multi_reduction <maximumf>, %46, %cst_31 [1] : vector<8x8xf32> to vector<8xf32>
    %48 = vector.shape_cast %47 : vector<8xf32> to vector<8x1xf32>
    %49 = vector.broadcast %48 : vector<8x1xf32> to vector<8x8xf32>
    %50 = arith.subf %46, %49 : vector<8x8xf32>
    %51 = math.exp %50 : vector<8x8xf32>
    %cst_32 = arith.constant dense<0.000000e+00> : vector<8xf32>
    %52 = vector.multi_reduction <add>, %51, %cst_32 [1] : vector<8x8xf32> to vector<8xf32>
    %53 = vector.shape_cast %52 : vector<8xf32> to vector<8x1xf32>
    %54 = tpu.reciprocal %53 {approx = true} : vector<8x1xf32> -> vector<8x1xf32>
    %55 = vector.broadcast %54 : vector<8x1xf32> to vector<8x8xf32>
    %56 = arith.mulf %51, %55 : vector<8x8xf32>
    %57 = arith.truncf %56 : vector<8x8xf32> to vector<8x8xbf16>
    %58 = arith.truncf %35 : vector<8x32xf32> to vector<8x32xbf16>
    %cst_33 = arith.constant dense<0.000000e+00> : vector<8x32xf32>
    %59 = tpu.matmul %57, %58, %cst_33 {dimension_numbers = #tpu.dot_dimension_numbers<[1], [0], [0], [1], [0, 0, 1, 1], [], []>} : vector<8x8xbf16>, vector<8x32xbf16>, vector<8x32xf32> -> vector<8x32xf32>
    %60 = vector.extract_strided_slice %32 {offsets = [0, 0], sizes = [32, 32], strides = [1, 1]} : vector<128x32xf32> to vector<32x32xf32>
    %61 = arith.truncf %59 : vector<8x32xf32> to vector<8x32xbf16>
    %62 = arith.truncf %60 : vector<32x32xf32> to vector<32x32xbf16>
    %cst_34 = arith.constant dense<0.000000e+00> : vector<8x32xf32>
    %63 = tpu.matmul %61, %62, %cst_34 {dimension_numbers = #tpu.dot_dimension_numbers<[1], [0], [0], [1], [0, 0, 1, 1], [], []>} : vector<8x32xbf16>, vector<32x32xbf16>, vector<8x32xf32> -> vector<8x32xf32>
    %64 = arith.addf %19, %63 : vector<8x32xf32>
    %65 = vector.extract_strided_slice %23 {offsets = [0, 32], sizes = [8, 32], strides = [1, 1]} : vector<8x128xf32> to vector<8x32xf32>
    %66 = vector.extract_strided_slice %27 {offsets = [0, 32], sizes = [8, 32], strides = [1, 1]} : vector<8x128xf32> to vector<8x32xf32>
    %67 = vector.extract_strided_slice %31 {offsets = [0, 32], sizes = [8, 32], strides = [1, 1]} : vector<8x128xf32> to vector<8x32xf32>
    %68 = tpu.transpose %66, [1, 0] : vector<8x32xf32> -> vector<32x8xf32>
    %69 = arith.truncf %65 : vector<8x32xf32> to vector<8x32xbf16>
    %70 = arith.truncf %68 : vector<32x8xf32> to vector<32x8xbf16>
    %cst_35 = arith.constant dense<0.000000e+00> : vector<8x8xf32>
    %71 = tpu.matmul %69, %70, %cst_35 {dimension_numbers = #tpu.dot_dimension_numbers<[1], [0], [0], [1], [0, 0, 1, 1], [], []>} : vector<8x32xbf16>, vector<32x8xbf16>, vector<8x8xf32> -> vector<8x8xf32>
    %72 = arith.addf %71, %7 : vector<8x8xf32>
    %cst_36 = arith.constant 0.000000e+00 : f32
    %73 = vector.broadcast %cst_36 : f32 to vector<1x8xf32>
    %74 = arith.cmpf ogt, %5, %73 : vector<1x8xf32>
    %cst_37 = arith.constant -1.000000e+09 : f32
    %75 = vector.shape_cast %74 : vector<1x8xi1> to vector<1x8xi1>
    %76 = vector.broadcast %75 : vector<1x8xi1> to vector<8x8xi1>
    %77 = vector.broadcast %cst_37 : f32 to vector<8x8xf32>
    %78 = arith.select %76, %72, %77 : vector<8x8xi1>, vector<8x8xf32>
    %cst_38 = arith.constant dense<0xFF800000> : vector<8xf32>
    %79 = vector.multi_reduction <maximumf>, %78, %cst_38 [1] : vector<8x8xf32> to vector<8xf32>
    %80 = vector.shape_cast %79 : vector<8xf32> to vector<8x1xf32>
    %81 = vector.broadcast %80 : vector<8x1xf32> to vector<8x8xf32>
    %82 = arith.subf %78, %81 : vector<8x8xf32>
    %83 = math.exp %82 : vector<8x8xf32>
    %cst_39 = arith.constant dense<0.000000e+00> : vector<8xf32>
    %84 = vector.multi_reduction <add>, %83, %cst_39 [1] : vector<8x8xf32> to vector<8xf32>
    %85 = vector.shape_cast %84 : vector<8xf32> to vector<8x1xf32>
    %86 = tpu.reciprocal %85 {approx = true} : vector<8x1xf32> -> vector<8x1xf32>
    %87 = vector.broadcast %86 : vector<8x1xf32> to vector<8x8xf32>
    %88 = arith.mulf %83, %87 : vector<8x8xf32>
    %89 = arith.truncf %88 : vector<8x8xf32> to vector<8x8xbf16>
    %90 = arith.truncf %67 : vector<8x32xf32> to vector<8x32xbf16>
    %cst_40 = arith.constant dense<0.000000e+00> : vector<8x32xf32>
    %91 = tpu.matmul %89, %90, %cst_40 {dimension_numbers = #tpu.dot_dimension_numbers<[1], [0], [0], [1], [0, 0, 1, 1], [], []>} : vector<8x8xbf16>, vector<8x32xbf16>, vector<8x32xf32> -> vector<8x32xf32>
    %92 = vector.extract_strided_slice %32 {offsets = [32, 0], sizes = [32, 32], strides = [1, 1]} : vector<128x32xf32> to vector<32x32xf32>
    %93 = arith.truncf %91 : vector<8x32xf32> to vector<8x32xbf16>
    %94 = arith.truncf %92 : vector<32x32xf32> to vector<32x32xbf16>
    %cst_41 = arith.constant dense<0.000000e+00> : vector<8x32xf32>
    %95 = tpu.matmul %93, %94, %cst_41 {dimension_numbers = #tpu.dot_dimension_numbers<[1], [0], [0], [1], [0, 0, 1, 1], [], []>} : vector<8x32xbf16>, vector<32x32xbf16>, vector<8x32xf32> -> vector<8x32xf32>
    %96 = arith.addf %64, %95 : vector<8x32xf32>
    %97 = vector.extract_strided_slice %23 {offsets = [0, 64], sizes = [8, 32], strides = [1, 1]} : vector<8x128xf32> to vector<8x32xf32>
    %98 = vector.extract_strided_slice %27 {offsets = [0, 64], sizes = [8, 32], strides = [1, 1]} : vector<8x128xf32> to vector<8x32xf32>
    %99 = vector.extract_strided_slice %31 {offsets = [0, 64], sizes = [8, 32], strides = [1, 1]} : vector<8x128xf32> to vector<8x32xf32>
    %100 = tpu.transpose %98, [1, 0] : vector<8x32xf32> -> vector<32x8xf32>
    %101 = arith.truncf %97 : vector<8x32xf32> to vector<8x32xbf16>
    %102 = arith.truncf %100 : vector<32x8xf32> to vector<32x8xbf16>
    %cst_42 = arith.constant dense<0.000000e+00> : vector<8x8xf32>
    %103 = tpu.matmul %101, %102, %cst_42 {dimension_numbers = #tpu.dot_dimension_numbers<[1], [0], [0], [1], [0, 0, 1, 1], [], []>} : vector<8x32xbf16>, vector<32x8xbf16>, vector<8x8xf32> -> vector<8x8xf32>
    %104 = arith.addf %103, %7 : vector<8x8xf32>
    %cst_43 = arith.constant 0.000000e+00 : f32
    %105 = vector.broadcast %cst_43 : f32 to vector<1x8xf32>
    %106 = arith.cmpf ogt, %5, %105 : vector<1x8xf32>
    %cst_44 = arith.constant -1.000000e+09 : f32
    %107 = vector.shape_cast %106 : vector<1x8xi1> to vector<1x8xi1>
    %108 = vector.broadcast %107 : vector<1x8xi1> to vector<8x8xi1>
    %109 = vector.broadcast %cst_44 : f32 to vector<8x8xf32>
    %110 = arith.select %108, %104, %109 : vector<8x8xi1>, vector<8x8xf32>
    %cst_45 = arith.constant dense<0xFF800000> : vector<8xf32>
    %111 = vector.multi_reduction <maximumf>, %110, %cst_45 [1] : vector<8x8xf32> to vector<8xf32>
    %112 = vector.shape_cast %111 : vector<8xf32> to vector<8x1xf32>
    %113 = vector.broadcast %112 : vector<8x1xf32> to vector<8x8xf32>
    %114 = arith.subf %110, %113 : vector<8x8xf32>
    %115 = math.exp %114 : vector<8x8xf32>
    %cst_46 = arith.constant dense<0.000000e+00> : vector<8xf32>
    %116 = vector.multi_reduction <add>, %115, %cst_46 [1] : vector<8x8xf32> to vector<8xf32>
    %117 = vector.shape_cast %116 : vector<8xf32> to vector<8x1xf32>
    %118 = tpu.reciprocal %117 {approx = true} : vector<8x1xf32> -> vector<8x1xf32>
    %119 = vector.broadcast %118 : vector<8x1xf32> to vector<8x8xf32>
    %120 = arith.mulf %115, %119 : vector<8x8xf32>
    %121 = arith.truncf %120 : vector<8x8xf32> to vector<8x8xbf16>
    %122 = arith.truncf %99 : vector<8x32xf32> to vector<8x32xbf16>
    %cst_47 = arith.constant dense<0.000000e+00> : vector<8x32xf32>
    %123 = tpu.matmul %121, %122, %cst_47 {dimension_numbers = #tpu.dot_dimension_numbers<[1], [0], [0], [1], [0, 0, 1, 1], [], []>} : vector<8x8xbf16>, vector<8x32xbf16>, vector<8x32xf32> -> vector<8x32xf32>
    %124 = vector.extract_strided_slice %32 {offsets = [64, 0], sizes = [32, 32], strides = [1, 1]} : vector<128x32xf32> to vector<32x32xf32>
    %125 = arith.truncf %123 : vector<8x32xf32> to vector<8x32xbf16>
    %126 = arith.truncf %124 : vector<32x32xf32> to vector<32x32xbf16>
    %cst_48 = arith.constant dense<0.000000e+00> : vector<8x32xf32>
    %127 = tpu.matmul %125, %126, %cst_48 {dimension_numbers = #tpu.dot_dimension_numbers<[1], [0], [0], [1], [0, 0, 1, 1], [], []>} : vector<8x32xbf16>, vector<32x32xbf16>, vector<8x32xf32> -> vector<8x32xf32>
    %128 = arith.addf %96, %127 : vector<8x32xf32>
    %129 = vector.extract_strided_slice %23 {offsets = [0, 96], sizes = [8, 32], strides = [1, 1]} : vector<8x128xf32> to vector<8x32xf32>
    %130 = vector.extract_strided_slice %27 {offsets = [0, 96], sizes = [8, 32], strides = [1, 1]} : vector<8x128xf32> to vector<8x32xf32>
    %131 = vector.extract_strided_slice %31 {offsets = [0, 96], sizes = [8, 32], strides = [1, 1]} : vector<8x128xf32> to vector<8x32xf32>
    %132 = tpu.transpose %130, [1, 0] : vector<8x32xf32> -> vector<32x8xf32>
    %133 = arith.truncf %129 : vector<8x32xf32> to vector<8x32xbf16>
    %134 = arith.truncf %132 : vector<32x8xf32> to vector<32x8xbf16>
    %cst_49 = arith.constant dense<0.000000e+00> : vector<8x8xf32>
    %135 = tpu.matmul %133, %134, %cst_49 {dimension_numbers = #tpu.dot_dimension_numbers<[1], [0], [0], [1], [0, 0, 1, 1], [], []>} : vector<8x32xbf16>, vector<32x8xbf16>, vector<8x8xf32> -> vector<8x8xf32>
    %136 = arith.addf %135, %7 : vector<8x8xf32>
    %cst_50 = arith.constant 0.000000e+00 : f32
    %137 = vector.broadcast %cst_50 : f32 to vector<1x8xf32>
    %138 = arith.cmpf ogt, %5, %137 : vector<1x8xf32>
    %cst_51 = arith.constant -1.000000e+09 : f32
    %139 = vector.shape_cast %138 : vector<1x8xi1> to vector<1x8xi1>
    %140 = vector.broadcast %139 : vector<1x8xi1> to vector<8x8xi1>
    %141 = vector.broadcast %cst_51 : f32 to vector<8x8xf32>
    %142 = arith.select %140, %136, %141 : vector<8x8xi1>, vector<8x8xf32>
    %cst_52 = arith.constant dense<0xFF800000> : vector<8xf32>
    %143 = vector.multi_reduction <maximumf>, %142, %cst_52 [1] : vector<8x8xf32> to vector<8xf32>
    %144 = vector.shape_cast %143 : vector<8xf32> to vector<8x1xf32>
    %145 = vector.broadcast %144 : vector<8x1xf32> to vector<8x8xf32>
    %146 = arith.subf %142, %145 : vector<8x8xf32>
    %147 = math.exp %146 : vector<8x8xf32>
    %cst_53 = arith.constant dense<0.000000e+00> : vector<8xf32>
    %148 = vector.multi_reduction <add>, %147, %cst_53 [1] : vector<8x8xf32> to vector<8xf32>
    %149 = vector.shape_cast %148 : vector<8xf32> to vector<8x1xf32>
    %150 = tpu.reciprocal %149 {approx = true} : vector<8x1xf32> -> vector<8x1xf32>
    %151 = vector.broadcast %150 : vector<8x1xf32> to vector<8x8xf32>
    %152 = arith.mulf %147, %151 : vector<8x8xf32>
    %153 = arith.truncf %152 : vector<8x8xf32> to vector<8x8xbf16>
    %154 = arith.truncf %131 : vector<8x32xf32> to vector<8x32xbf16>
    %cst_54 = arith.constant dense<0.000000e+00> : vector<8x32xf32>
    %155 = tpu.matmul %153, %154, %cst_54 {dimension_numbers = #tpu.dot_dimension_numbers<[1], [0], [0], [1], [0, 0, 1, 1], [], []>} : vector<8x8xbf16>, vector<8x32xbf16>, vector<8x32xf32> -> vector<8x32xf32>
    %156 = vector.extract_strided_slice %32 {offsets = [96, 0], sizes = [32, 32], strides = [1, 1]} : vector<128x32xf32> to vector<32x32xf32>
    %157 = arith.truncf %155 : vector<8x32xf32> to vector<8x32xbf16>
    %158 = arith.truncf %156 : vector<32x32xf32> to vector<32x32xbf16>
    %cst_55 = arith.constant dense<0.000000e+00> : vector<8x32xf32>
    %159 = tpu.matmul %157, %158, %cst_55 {dimension_numbers = #tpu.dot_dimension_numbers<[1], [0], [0], [1], [0, 0, 1, 1], [], []>} : vector<8x32xbf16>, vector<32x32xbf16>, vector<8x32xf32> -> vector<8x32xf32>
    %160 = arith.addf %128, %159 : vector<8x32xf32>
    %c0_56 = arith.constant 0 : index
    %c0_57 = arith.constant 0 : index
    %c0_58 = arith.constant 0 : index
    %161 = vector.load %arg11[%c0_56, %c0_57, %c0_58] : memref<1x8x32xf32, #tpu.memory_space<vmem>>, vector<1x8x32xf32>
    %162 = vector.shape_cast %161 : vector<1x8x32xf32> to vector<8x32xf32>
    %163 = vector.shape_cast %160 : vector<8x32xf32> to vector<1x8x32xf32>
    tpu.vector_store %arg11[%c0_56, %c0_57, %c0_58], %163 {strides = array<i32>} : memref<1x8x32xf32, #tpu.memory_space<vmem>>, vector<1x8x32xf32>,
    return
  }
  func.func @transform_0(%arg0: i32) -> (i32, i32, i32) {
    %c0_i32 = arith.constant 0 : i32
    %c0_i32_0 = arith.constant 0 : i32
    %c0_i32_1 = arith.constant 0 : i32
    return %arg0, %c0_i32, %c0_i32_0 : i32, i32, i32
  }
  func.func @transform_1(%arg0: i32) -> (i32, i32, i32) {
    %c0_i32 = arith.constant 0 : i32
    %c0_i32_0 = arith.constant 0 : i32
    %c0_i32_1 = arith.constant 0 : i32
    return %arg0, %c0_i32, %c0_i32_0 : i32, i32, i32
  }
  func.func @transform_2(%arg0: i32) -> (i32, i32, i32) {
    %c0_i32 = arith.constant 0 : i32
    %c0_i32_0 = arith.constant 0 : i32
    %c0_i32_1 = arith.constant 0 : i32
    return %arg0, %c0_i32, %c0_i32_0 : i32, i32, i32
  }
  func.func @transform_3(%arg0: i32) -> (i32, i32, i32) {
    %c0_i32 = arith.constant 0 : i32
    %c0_i32_0 = arith.constant 0 : i32
    %c0_i32_1 = arith.constant 0 : i32
    return %arg0, %c0_i32, %c0_i32_0 : i32, i32, i32
  }
  func.func @transform_4(%arg0: i32) -> (i32, i32) {
    %c0_i32 = arith.constant 0 : i32
    %c0_i32_0 = arith.constant 0 : i32
    %c0_i32_1 = arith.constant 0 : i32
    return %c0_i32, %c0_i32_0 : i32, i32
  }
  func.func @transform_5(%arg0: i32) -> (i32, i32) {
    %c0_i32 = arith.constant 0 : i32
    %c0_i32_0 = arith.constant 0 : i32
    %c0_i32_1 = arith.constant 0 : i32
    return %c0_i32, %c0_i32_0 : i32, i32
  }
  func.func @transform_6(%arg0: i32) -> (i32, i32) {
    %c0_i32 = arith.constant 0 : i32
    %c0_i32_0 = arith.constant 0 : i32
    %c0_i32_1 = arith.constant 0 : i32
    return %c0_i32, %c0_i32_0 : i32, i32
  }
  func.func @transform_7(%arg0: i32) -> (i32, i32) {
    %c0_i32 = arith.constant 0 : i32
    %c0_i32_0 = arith.constant 0 : i32
    %c0_i32_1 = arith.constant 0 : i32
    return %c0_i32, %c0_i32_0 : i32, i32
  }
  func.func @transform_8(%arg0: i32) -> (i32, i32) {
    %c0_i32 = arith.constant 0 : i32
    %c0_i32_0 = arith.constant 0 : i32
    %c0_i32_1 = arith.constant 0 : i32
    return %c0_i32, %c0_i32_0 : i32, i32
  }
  func.func @transform_9(%arg0: i32) -> (i32, i32) {
    %c0_i32 = arith.constant 0 : i32
    %c0_i32_0 = arith.constant 0 : i32
    %c0_i32_1 = arith.constant 0 : i32
    return %c0_i32, %c0_i32_0 : i32, i32
  }
  func.func @transform_10(%arg0: i32) -> (i32, i32, i32) {
    %c0_i32 = arith.constant 0 : i32
    %c0_i32_0 = arith.constant 0 : i32
    %c0_i32_1 = arith.constant 0 : i32
    return %arg0, %c0_i32, %c0_i32_0 : i32, i32, i32
  }
}

</mosaic_0001>

<llo_original>
// kernel: tpu_custom_call.1
$region0: #{tpu_custom_call.1}
  #allocation0 [shape = 'u32[]', space=smem, size = 0x4, offset = 0x4, fixed_abs, tag = 'smem constant byte address 0x4 - core index']
  #allocation1 [shape = 'u32[144,128]{1,0:T(1,128)}', space=vmem, size = 0x12000, scoped, tag = 'internal scratch']
  %s0 = inlined_call_operand.vmem [shape: f32[4,8,32], index: 0, kind: input, shape index: {}]
  %s1 = inlined_call_operand.vmem [shape: f32[4,8,8], index: 1, kind: input, shape index: {}]
  %s2 = inlined_call_operand.hbm [shape: f32[4,1,8], index: 2, kind: input, shape index: {}]
  %s3 = inlined_call_operand.vmem [shape: f32[4,8,8], index: 3, kind: input, shape index: {}]
  %s4 = inlined_call_operand.vmem [shape: f32[32,32], index: 4, kind: input, shape index: {}]
  %s5 = inlined_call_operand.vmem [shape: f32[1,32], index: 5, kind: input, shape index: {}]
  %s6 = inlined_call_operand.vmem [shape: f32[32,128], index: 6, kind: input, shape index: {}]
  %s7 = inlined_call_operand.hbm [shape: f32[32,128], index: 7, kind: input, shape index: {}]
  %s8 = inlined_call_operand.hbm [shape: f32[32,128], index: 8, kind: input, shape index: {}]
  %s9 = inlined_call_operand.vmem [shape: f32[128,32], index: 9, kind: input, shape index: {}]
  %s10 = inlined_call_operand.hbm [shape: f32[4,8,32], index: 10, kind: output, shape index: {}]
  %s11 = sld [smem:[#allocation0]]
  $region85: #{tpu_custom_call.1} parent=0
    _
  %s13 = ssub.s32 1, %s11
  %s14 = scalar_select 0, %s13, %s11
  $region1: #{tpu_custom_call.1} parent=0
    #allocation2 [shape = 'u8[1024]{0}', space=vmem, size = 0x400, scoped, tag = 'input window, operand 2']
    #allocation3 [shape = 's32[2]{0}', space=sflag, size = 0x8, scoped, tag = 'scoped memory for tpu_custom_call.1']
    #allocation4 [shape = 's32[2]{0}', space=sflag, size = 0x8, scoped, tag = 'scoped memory for tpu_custom_call.1']
    #allocation5 [shape = 'u8[16384]{0}', space=vmem, size = 0x4000, scoped, tag = 'input window, operand 7, single buffered']
    #allocation6 [shape = 's32[1]{0}', space=sflag, size = 0x4, scoped, tag = 'scoped memory for tpu_custom_call.1']
    #allocation7 [shape = 'u8[16384]{0}', space=vmem, size = 0x4000, scoped, tag = 'input window, operand 8, single buffered']
    #allocation8 [shape = 'u8[8192]{0}', space=vmem, size = 0x2000, scoped, tag = 'output window, operand 0']
    %15 = vsyncpa [#allocation3], 0
    %s16 = scalar_lea.sflag [#allocation3], 1
    %17 = vsyncpa %s16, 0
    %18 = vsyncpa [#allocation6], 0
    %19 = vsyncpa [#allocation4], 0
    %s20 = scalar_lea.sflag [#allocation4], 1
    %21 = vsyncpa %s20, 0
    loop: start=0, step=1, limit=6
    $region2: #{tpu_custom_call.1} parent=1 // loop_pre_header
      _
    $region3: #{tpu_custom_call.1} parent=1 // loop_header
      %s23 = sphi 0, %s27
      %p24 = scmp.ge.s32.totalorder %s23, 6
      %s33 = sphi 0, %s35
      %s36 = sphi 0, %s33
      %s37 = sphi 0, %s36
      %s53 = sphi 0, %s37
      %s59 = sphi 0, %s61
      %s62 = sphi 0, %s59
      %s63 = sphi 0, %s62
      %s79 = sphi 0, %s63
      %s85 = sphi 0, %s87
      %s88 = sphi 0, %s85
      %s89 = sphi 0, %s88
      %s105 = sphi 0, %s89
      %s111 = sphi 0, %s113
      %s114 = sphi 0, %s111
      %s115 = sphi 0, %s114
      %s131 = sphi 0, %s115
      %s135 = sphi 0, %s135
      %s137 = sphi 0, %s135
      %s138 = sphi 0, %s137
      %s152 = sphi 0, %s138
      %s156 = sphi 0, %s156
      %s158 = sphi 0, %s156
      %s159 = sphi 0, %s158
      %s173 = sphi 0, %s159
      %s177 = sphi 0, %s177
      %s179 = sphi 0, %s177
      %s180 = sphi 0, %s179
      %s194 = sphi 0, %s180
      %s198 = sphi 0, %s198
      %s200 = sphi 0, %s198
      %s201 = sphi 0, %s200
      %s215 = sphi 0, %s201
      %s219 = sphi 0, %s219
      %s221 = sphi 0, %s219
      %s222 = sphi 0, %s221
      %s236 = sphi 0, %s222
      %s240 = sphi 0, %s240
      %s242 = sphi 0, %s240
      %s243 = sphi 0, %s242
      %s257 = sphi 0, %s243
      %s263 = sphi 0, %s265
      %s266 = sphi 0, %s263
      %s267 = sphi 0, %s266
      %s283 = sphi 0, %s267
    $region4: #{tpu_custom_call.1} parent=1 // loop_header_branch
      %26 = sbr.rel (%p24) target = $region8
    $region5: #{tpu_custom_call.1} parent=1 // loop_body
      %s28 = ssub.s32 %s23, 1
      %s29 = ssub.s32 %s23, 2
      %s30 = sadd.s32 %s23, 1
      %s31 = ssub.s32 %s23, %s30
      %p32 = scmp.eq.s32.totalorder %s31, 0
      %s34 = sadd.s32 %s33, 1
      %s35 = scalar_select %p32, %s33, %s34
      %p38 = pneg %p32
      %p39 = scmp.eq.s32.totalorder %s23, 3
      %p40 = por %p38, %p39
      %p41 = scmp.ne.s32.totalorder %s33, %s36
      %p42 = scmp.eq.s32.totalorder %s23, 0
      %p43 = por %p41, %p42
      %p44 = scmp.ne.s32.totalorder %s33, %s36
      %p45 = scmp.eq.s32.totalorder %s28, 3
      %p46 = por %p44, %p45
      %p47 = scmp.ne.s32.totalorder %s36, %s37
      %p48 = scmp.eq.s32.totalorder %s28, 0
      %p49 = por %p47, %p48
      %p50 = scmp.ne.s32.totalorder %s36, %s37
      %p51 = scmp.eq.s32.totalorder %s29, 3
      %p52 = por %p50, %p51
      %p54 = scmp.ne.s32.totalorder %s37, %s53
      %p55 = scmp.eq.s32.totalorder %s29, 0
      %p56 = por %p54, %p55
      %s57 = ssub.s32 %s23, %s30
      %p58 = scmp.eq.s32.totalorder %s57, 0
      %s60 = sadd.s32 %s59, 1
      %s61 = scalar_select %p58, %s59, %s60
      %p64 = pneg %p58
      %p65 = scmp.eq.s32.totalorder %s23, 3
      %p66 = por %p64, %p65
      %p67 = scmp.ne.s32.totalorder %s59, %s62
      %p68 = scmp.eq.s32.totalorder %s23, 0
      %p69 = por %p67, %p68
      %p70 = scmp.ne.s32.totalorder %s59, %s62
      %p71 = scmp.eq.s32.totalorder %s28, 3
      %p72 = por %p70, %p71
      %p73 = scmp.ne.s32.totalorder %s62, %s63
      %p74 = scmp.eq.s32.totalorder %s28, 0
      %p75 = por %p73, %p74
      %p76 = scmp.ne.s32.totalorder %s62, %s63
      %p77 = scmp.eq.s32.totalorder %s29, 3
      %p78 = por %p76, %p77
      %p80 = scmp.ne.s32.totalorder %s63, %s79
      %p81 = scmp.eq.s32.totalorder %s29, 0
      %p82 = por %p80, %p81
      %s83 = ssub.s32 %s23, %s30
      %p84 = scmp.eq.s32.totalorder %s83, 0
      %s86 = sadd.s32 %s85, 1
      %s87 = scalar_select %p84, %s85, %s86
      %p90 = pneg %p84
      %p91 = scmp.eq.s32.totalorder %s23, 3
      %p92 = por %p90, %p91
      %p93 = scmp.ne.s32.totalorder %s85, %s88
      %p94 = scmp.eq.s32.totalorder %s23, 0
      %p95 = por %p93, %p94
      %p96 = scmp.ne.s32.totalorder %s85, %s88
      %p97 = scmp.eq.s32.totalorder %s28, 3
      %p98 = por %p96, %p97
      %p99 = scmp.ne.s32.totalorder %s88, %s89
      %p100 = scmp.eq.s32.totalorder %s28, 0
      %p101 = por %p99, %p100
      %p102 = scmp.ne.s32.totalorder %s88, %s89
      %p103 = scmp.eq.s32.totalorder %s29, 3
      %p104 = por %p102, %p103
      %p106 = scmp.ne.s32.totalorder %s89, %s105
      %p107 = scmp.eq.s32.totalorder %s29, 0
      %p108 = por %p106, %p107
      %s109 = ssub.s32 %s23, %s30
      %p110 = scmp.eq.s32.totalorder %s109, 0
      %s112 = sadd.s32 %s111, 1
      %s113 = scalar_select %p110, %s111, %s112
      %p116 = pneg %p110
      %p117 = scmp.eq.s32.totalorder %s23, 3
      %p118 = por %p116, %p117
      %p119 = scmp.ne.s32.totalorder %s111, %s114
      %p120 = scmp.eq.s32.totalorder %s23, 0
      %p121 = por %p119, %p120
      %p122 = scmp.ne.s32.totalorder %s111, %s114
      %p123 = scmp.eq.s32.totalorder %s28, 3
      %p124 = por %p122, %p123
      %p125 = scmp.ne.s32.totalorder %s114, %s115
      %p126 = scmp.eq.s32.totalorder %s28, 0
      %p127 = por %p125, %p126
      %p128 = scmp.ne.s32.totalorder %s114, %s115
      %p129 = scmp.eq.s32.totalorder %s29, 3
      %p130 = por %p128, %p129
      %p132 = scmp.ne.s32.totalorder %s115, %s131
      %p133 = scmp.eq.s32.totalorder %s29, 0
      %p134 = por %p132, %p133
      %s136 = sadd.s32 %s135, 1
      %p139 = scmp.eq.s32.totalorder %s23, 3
      %p140 = scmp.ne.s32.totalorder %s135, %s137
      %p141 = scmp.eq.s32.totalorder %s23, 0
      %p142 = por %p140, %p141
      %p143 = scmp.ne.s32.totalorder %s135, %s137
      %p144 = scmp.eq.s32.totalorder %s28, 3
      %p145 = por %p143, %p144
      %p146 = scmp.ne.s32.totalorder %s137, %s138
      %p147 = scmp.eq.s32.totalorder %s28, 0
      %p148 = por %p146, %p147
      %p149 = scmp.ne.s32.totalorder %s137, %s138
      %p150 = scmp.eq.s32.totalorder %s29, 3
      %p151 = por %p149, %p150
      %p153 = scmp.ne.s32.totalorder %s138, %s152
      %p154 = scmp.eq.s32.totalorder %s29, 0
      %p155 = por %p153, %p154
      %s157 = sadd.s32 %s156, 1
      %p160 = scmp.eq.s32.totalorder %s23, 3
      %p161 = scmp.ne.s32.totalorder %s156, %s158
      %p162 = scmp.eq.s32.totalorder %s23, 0
      %p163 = por %p161, %p162
      %p164 = scmp.ne.s32.totalorder %s156, %s158
      %p165 = scmp.eq.s32.totalorder %s28, 3
      %p166 = por %p164, %p165
      %p167 = scmp.ne.s32.totalorder %s158, %s159
      %p168 = scmp.eq.s32.totalorder %s28, 0
      %p169 = por %p167, %p168
      %p170 = scmp.ne.s32.totalorder %s158, %s159
      %p171 = scmp.eq.s32.totalorder %s29, 3
      %p172 = por %p170, %p171
      %p174 = scmp.ne.s32.totalorder %s159, %s173
      %p175 = scmp.eq.s32.totalorder %s29, 0
      %p176 = por %p174, %p175
      %s178 = sadd.s32 %s177, 1
      %p181 = scmp.eq.s32.totalorder %s23, 3
      %p182 = scmp.ne.s32.totalorder %s177, %s179
      %p183 = scmp.eq.s32.totalorder %s23, 0
      %p184 = por %p182, %p183
      %p185 = scmp.ne.s32.totalorder %s177, %s179
      %p186 = scmp.eq.s32.totalorder %s28, 3
      %p187 = por %p185, %p186
      %p188 = scmp.ne.s32.totalorder %s179, %s180
      %p189 = scmp.eq.s32.totalorder %s28, 0
      %p190 = por %p188, %p189
      %p191 = scmp.ne.s32.totalorder %s179, %s180
      %p192 = scmp.eq.s32.totalorder %s29, 3
      %p193 = por %p191, %p192
      %p195 = scmp.ne.s32.totalorder %s180, %s194
      %p196 = scmp.eq.s32.totalorder %s29, 0
      %p197 = por %p195, %p196
      %s199 = sadd.s32 %s198, 1
      %p202 = scmp.eq.s32.totalorder %s23, 3
      %p203 = scmp.ne.s32.totalorder %s198, %s200
      %p204 = scmp.eq.s32.totalorder %s23, 0
      %p205 = por %p203, %p204
      %p206 = scmp.ne.s32.totalorder %s198, %s200
      %p207 = scmp.eq.s32.totalorder %s28, 3
      %p208 = por %p206, %p207
      %p209 = scmp.ne.s32.totalorder %s200, %s201
      %p210 = scmp.eq.s32.totalorder %s28, 0
      %p211 = por %p209, %p210
      %p212 = scmp.ne.s32.totalorder %s200, %s201
      %p213 = scmp.eq.s32.totalorder %s29, 3
      %p214 = por %p212, %p213
      %p216 = scmp.ne.s32.totalorder %s201, %s215
      %p217 = scmp.eq.s32.totalorder %s29, 0
      %p218 = por %p216, %p217
      %s220 = sadd.s32 %s219, 1
      %p223 = scmp.eq.s32.totalorder %s23, 3
      %p224 = scmp.ne.s32.totalorder %s219, %s221
      %p225 = scmp.eq.s32.totalorder %s23, 0
      %p226 = por %p224, %p225
      %p227 = scmp.ne.s32.totalorder %s219, %s221
      %p228 = scmp.eq.s32.totalorder %s28, 3
      %p229 = por %p227, %p228
      %p230 = scmp.ne.s32.totalorder %s221, %s222
      %p231 = scmp.eq.s32.totalorder %s28, 0
      %p232 = por %p230, %p231
      %p233 = scmp.ne.s32.totalorder %s221, %s222
      %p234 = scmp.eq.s32.totalorder %s29, 3
      %p235 = por %p233, %p234
      %p237 = scmp.ne.s32.totalorder %s222, %s236
      %p238 = scmp.eq.s32.totalorder %s29, 0
      %p239 = por %p237, %p238
      %s241 = sadd.s32 %s240, 1
      %p244 = scmp.eq.s32.totalorder %s23, 3
      %p245 = scmp.ne.s32.totalorder %s240, %s242
      %p246 = scmp.eq.s32.totalorder %s23, 0
      %p247 = por %p245, %p246
      %p248 = scmp.ne.s32.totalorder %s240, %s242
      %p249 = scmp.eq.s32.totalorder %s28, 3
      %p250 = por %p248, %p249
      %p251 = scmp.ne.s32.totalorder %s242, %s243
      %p252 = scmp.eq.s32.totalorder %s28, 0
      %p253 = por %p251, %p252
      %p254 = scmp.ne.s32.totalorder %s242, %s243
      %p255 = scmp.eq.s32.totalorder %s29, 3
      %p256 = por %p254, %p255
      %p258 = scmp.ne.s32.totalorder %s243, %s257
      %p259 = scmp.eq.s32.totalorder %s29, 0
      %p260 = por %p258, %p259
      %s261 = ssub.s32 %s23, %s30
      %p262 = scmp.eq.s32.totalorder %s261, 0
      %s264 = sadd.s32 %s263, 1
      %s265 = scalar_select %p262, %s263, %s264
      %p268 = pneg %p262
      %p269 = scmp.eq.s32.totalorder %s23, 3
      %p270 = por %p268, %p269
      %p271 = scmp.ne.s32.totalorder %s263, %s266
      %p272 = scmp.eq.s32.totalorder %s23, 0
      %p273 = por %p271, %p272
      %p274 = scmp.ne.s32.totalorder %s263, %s266
      %p275 = scmp.eq.s32.totalorder %s28, 3
      %p276 = por %p274, %p275
      %p277 = scmp.ne.s32.totalorder %s266, %s267
      %p278 = scmp.eq.s32.totalorder %s28, 0
      %p279 = por %p277, %p278
      %p280 = scmp.ne.s32.totalorder %s266, %s267
      %p281 = scmp.eq.s32.totalorder %s29, 3
      %p282 = por %p280, %p281
      %p284 = scmp.ne.s32.totalorder %s267, %s283
      %p285 = scmp.eq.s32.totalorder %s29, 0
      %p286 = por %p284, %p285
      %p287 = scmp.le.s32.totalorder 1, %s23
      %p288 = scmp.lt.s32.totalorder %s23, 5
      %p289 = pnand %p287, %p288
      %p290 = pneg %p289
      // Predicated region
      $region9: #{tpu_custom_call.1} parent=5 // pred_check
        _
      $region10: #{tpu_custom_call.1} parent=5 // pred_check_branch
        %292 = sbr.rel (%p289) target = $region12
      $region11: #{tpu_custom_call.1} parent=5 // pred_region
        %s293 = ssub.s32 %s23, 1
        // Predicated region
        $region13: #{tpu_custom_call.1} parent=11 // pred_check
          %p294 = pneg %p148
        $region14: #{tpu_custom_call.1} parent=11 // pred_check_branch
          %296 = sbr.rel (%p294) target = $region16
        $region15: #{tpu_custom_call.1} parent=11 // pred_region
          _
        $region16: #{tpu_custom_call.1} parent=11 // pred_fallthru
          _
        // Predicated region
        $region17: #{tpu_custom_call.1} parent=11 // pred_check
          %p297 = pneg %p169
        $region18: #{tpu_custom_call.1} parent=11 // pred_check_branch
          %299 = sbr.rel (%p297) target = $region20
        $region19: #{tpu_custom_call.1} parent=11 // pred_region
          _
        $region20: #{tpu_custom_call.1} parent=11 // pred_fallthru
          _
        // Predicated region
        $region21: #{tpu_custom_call.1} parent=11 // pred_check
          %p300 = pneg %p190
        $region22: #{tpu_custom_call.1} parent=11 // pred_check_branch
          %302 = sbr.rel (%p300) target = $region24
        $region23: #{tpu_custom_call.1} parent=11 // pred_region
          _
        $region24: #{tpu_custom_call.1} parent=11 // pred_fallthru
          _
        // Predicated region
        $region25: #{tpu_custom_call.1} parent=11 // pred_check
          %p303 = pneg %p211
        $region26: #{tpu_custom_call.1} parent=11 // pred_check_branch
          %305 = sbr.rel (%p303) target = $region28
        $region27: #{tpu_custom_call.1} parent=11 // pred_region
          %s307 = ssub.s32 512, 512
          %308 = vsyncadd [#allocation6], %s307
          %s309 = sshll.u32 [#allocation5], 4
          %s310 = int_to_ptr.vmem [resolvable:$true] %s309
          %315 = dma.hbm_to_vmem [thread:$0]  %s7, 512, %s310, [#allocation6], 128, 128, 8
        $region28: #{tpu_custom_call.1} parent=11 // pred_fallthru
          _
        // Predicated region
        $region29: #{tpu_custom_call.1} parent=11 // pred_check
          %p316 = pneg %p232
        $region30: #{tpu_custom_call.1} parent=11 // pred_check_branch
          %318 = sbr.rel (%p316) target = $region32
        $region31: #{tpu_custom_call.1} parent=11 // pred_region
          %s320 = ssub.s32 512, 512
          %321 = vsyncadd [#allocation6], %s320
          %s322 = sshll.u32 [#allocation7], 4
          %s323 = int_to_ptr.vmem [resolvable:$true] %s322
          %328 = dma.hbm_to_vmem [thread:$0]  %s8, 512, %s323, [#allocation6], 128, 128, 8
        $region32: #{tpu_custom_call.1} parent=11 // pred_fallthru
          _
        // Predicated region
        $region33: #{tpu_custom_call.1} parent=11 // pred_check
          %p329 = pneg %p253
        $region34: #{tpu_custom_call.1} parent=11 // pred_check_branch
          %331 = sbr.rel (%p329) target = $region36
        $region35: #{tpu_custom_call.1} parent=11 // pred_region
          _
        $region36: #{tpu_custom_call.1} parent=11 // pred_fallthru
          _
      $region12: #{tpu_custom_call.1} parent=5 // pred_fallthru
        _
      %p332 = scmp.lt.s32.totalorder %s23, 4
      // Predicated region
      $region37: #{tpu_custom_call.1} parent=5 // pred_check
        %p333 = pneg %p332
      $region38: #{tpu_custom_call.1} parent=5 // pred_check_branch
        %335 = sbr.rel (%p333) target = $region40
      $region39: #{tpu_custom_call.1} parent=5 // pred_region
        // Predicated region
        $region41: #{tpu_custom_call.1} parent=39 // pred_check
          %p336 = pneg %p43
        $region42: #{tpu_custom_call.1} parent=39 // pred_check_branch
          %338 = sbr.rel (%p336) target = $region44
        $region43: #{tpu_custom_call.1} parent=39 // pred_region
          %p339 = scmp.lt.s32.totalorder %s23, 3
          %s340 = scalar_select %p339, %s23, 3
          %s341 = smul.addr %s340, 8
          %s342 = scalar_lea.vmem %s0, %s341
        $region44: #{tpu_custom_call.1} parent=39 // pred_fallthru
          _
        // Predicated region
        $region45: #{tpu_custom_call.1} parent=39 // pred_check
          %p343 = pneg %p69
        $region46: #{tpu_custom_call.1} parent=39 // pred_check_branch
          %345 = sbr.rel (%p343) target = $region48
        $region47: #{tpu_custom_call.1} parent=39 // pred_region
          %p346 = scmp.lt.s32.totalorder %s23, 3
          %s347 = scalar_select %p346, %s23, 3
          %s348 = smul.addr %s347, 8
          %s349 = scalar_lea.vmem %s1, %s348
        $region48: #{tpu_custom_call.1} parent=39 // pred_fallthru
          _
        // Predicated region
        $region49: #{tpu_custom_call.1} parent=39 // pred_check
          %p350 = pneg %p95
        $region50: #{tpu_custom_call.1} parent=39 // pred_check_branch
          %352 = sbr.rel (%p350) target = $region52
        $region51: #{tpu_custom_call.1} parent=39 // pred_region
          %s353 = sand.u32 %s85, 1
          %s354 = scalar_lea.sflag [#allocation3], %s353
          %s355 = sand.u32 %s85, 1
          %s356 = scalar_lea.vmem [#allocation2], %s355
          %s358 = ssub.s32 16, 16
          %359 = vsyncadd %s354, %s358
          %s360 = smul.addr %s23, 16
          %s361 = scalar_lea.hbm %s2, %s360
          %s363 = sshll.u32 %s356, 4
          %s364 = int_to_ptr.vmem [resolvable:$true] %s363
          %366 = dma.hbm_to_vmem [thread:$0]  %s361, 16, %s364, %s354
        $region52: #{tpu_custom_call.1} parent=39 // pred_fallthru
          _
        // Predicated region
        $region53: #{tpu_custom_call.1} parent=39 // pred_check
          %p367 = pneg %p121
        $region54: #{tpu_custom_call.1} parent=39 // pred_check_branch
          %369 = sbr.rel (%p367) target = $region56
        $region55: #{tpu_custom_call.1} parent=39 // pred_region
          %p370 = scmp.lt.s32.totalorder %s23, 3
          %s371 = scalar_select %p370, %s23, 3
          %s372 = smul.addr %s371, 8
          %s373 = scalar_lea.vmem %s3, %s372
        $region56: #{tpu_custom_call.1} parent=39 // pred_fallthru
          _
      $region40: #{tpu_custom_call.1} parent=5 // pred_fallthru
        _
      %p374 = scmp.le.s32.totalorder 1, %s23
      %p375 = scmp.lt.s32.totalorder %s23, 5
      %p376 = pnand %p374, %p375
      %p377 = pneg %p376
      // Predicated region
      $region57: #{tpu_custom_call.1} parent=5 // pred_check
        _
      $region58: #{tpu_custom_call.1} parent=5 // pred_check_branch
        %379 = sbr.rel (%p376) target = $region60
      $region59: #{tpu_custom_call.1} parent=5 // pred_region
        %s380 = ssub.s32 %s23, 1
        %s381 = sand.u32 %s88, 1
        %s382 = scalar_lea.sflag [#allocation3], %s381
        %s383 = sand.u32 %s88, 1
        %s384 = scalar_lea.vmem [#allocation2], %s383
        // Predicated region
        $region61: #{tpu_custom_call.1} parent=59 // pred_check
          %p385 = pneg %p101
        $region62: #{tpu_custom_call.1} parent=59 // pred_check_branch
          %387 = sbr.rel (%p385) target = $region64
        $region63: #{tpu_custom_call.1} parent=59 // pred_region
          %388 = dma.done %s382, 16
        $region64: #{tpu_custom_call.1} parent=59 // pred_fallthru
          _
        // Predicated region
        $region65: #{tpu_custom_call.1} parent=59 // pred_check
          %p389 = pneg %p211
        $region66: #{tpu_custom_call.1} parent=59 // pred_check_branch
          %391 = sbr.rel (%p389) target = $region68
        $region67: #{tpu_custom_call.1} parent=59 // pred_region
          %392 = dma.done [#allocation6], 512
        $region68: #{tpu_custom_call.1} parent=59 // pred_fallthru
          _
        // Predicated region
        $region69: #{tpu_custom_call.1} parent=59 // pred_check
          %p393 = pneg %p232
        $region70: #{tpu_custom_call.1} parent=59 // pred_check_branch
          %395 = sbr.rel (%p393) target = $region72
        $region71: #{tpu_custom_call.1} parent=59 // pred_region
          %396 = dma.done [#allocation6], 512
        $region72: #{tpu_custom_call.1} parent=59 // pred_fallthru
          _
        %p397 = scmp.lt.s32.totalorder %s28, 3
        %s398 = scalar_select %p397, %s28, 3
        %s399 = smul.addr %s398, 8
        %s400 = scalar_lea.vmem %s0, %s399
        %p401 = pneg %p49
        %p402 = pneg %p46
        %p403 = scmp.lt.s32.totalorder %s28, 3
        %s404 = scalar_select %p403, %s28, 3
        %s405 = smul.addr %s404, 8
        %s406 = scalar_lea.vmem %s1, %s405
        %p407 = pneg %p75
        %p408 = pneg %p72
        %s409 = sand.u32 %s88, 1
        %s410 = scalar_lea.sflag [#allocation3], %s409
        %s411 = sand.u32 %s88, 1
        %s412 = scalar_lea.vmem [#allocation2], %s411
        %p413 = pneg %p101
        %p414 = pneg %p98
        %p415 = scmp.lt.s32.totalorder %s28, 3
        %s416 = scalar_select %p415, %s28, 3
        %s417 = smul.addr %s416, 8
        %s418 = scalar_lea.vmem %s3, %s417
        %p419 = pneg %p127
        %p420 = pneg %p124
        %p421 = pneg %p148
        %p422 = pneg %p145
        %p423 = pneg %p169
        %p424 = pneg %p166
        %p425 = pneg %p190
        %p426 = pneg %p187
        %p427 = pneg %p211
        %p428 = pneg %p208
        %p429 = pneg %p232
        %p430 = pneg %p229
        %p431 = pneg %p253
        %p432 = pneg %p250
        %p433 = pneg %p279
        %p434 = pneg %p276
        %s435 = sand.u32 %s266, 1
        %s436 = scalar_lea.sflag [#allocation4], %s435
        %s437 = sand.u32 %s266, 1
        %s438 = smul.addr %s437, 8
        %s439 = scalar_lea.vmem [#allocation8], %s438
        %p440 = scmp.lt.s32.totalorder %s28, 3
        %s441 = scalar_select %p440, %s28, 3
        %s442 = smul.addr %s441, 8
        %s443 = scalar_lea.vmem %s0, %s442
        %p444 = scmp.lt.s32.totalorder %s28, 3
        %s445 = scalar_select %p444, %s28, 3
        %s446 = smul.addr %s445, 8
        %s447 = scalar_lea.vmem %s1, %s446
        %p448 = scmp.lt.s32.totalorder %s28, 3
        %s449 = scalar_select %p448, %s28, 3
        %s450 = smul.addr %s449, 8
        %s451 = scalar_lea.vmem %s3, %s450
        %v453 = vld [vmem:[%s443] sm:$0xff]
        %v454 = vld [vmem:[%s447] sm:$0xff]
        %v455 = vld [vmem:[%s384] sm:$0x1]
        %v456 = vld [vmem:[%s451] sm:$0xff]
        %v457 = vld [vmem:[%s4] sm:$0xff]
        %v458 = vld [vmem:[%s4 + $0x8] sm:$0xff]
        %v459 = vld [vmem:[%s4 + $0x10] sm:$0xff]
        %v460 = vld [vmem:[%s4 + $0x18] sm:$0xff]
        %v461 = vpack.c.bf16 %v453, %v453
        %v462 = vpack.c.bf16 %v458, %v457
        %v463 = vpack.c.bf16 %v460, %v459
        %vm464 = vcmask 261120
        %v466 = vsel %vm464, %v461, 0
        %468 = vmatprep.subr.bf16.mxu0 0
        %469 = vmatpush1.bf16.msra.mxu0 %v462
        %470 = vmatprep.subr.bf16.mxu0 0
        %471 = vmatpush1.bf16.msra.mxu0 %v463
        %472 = vmatprep.subr.bf16.mxu0 0
        %473 = vmatpush1.bf16.msra.mxu0 0
        %474 = vmatprep.subr.bf16.mxu0 0
        %475 = vmatpush1.bf16.msra.mxu0 0
        %476 = vmatprep.subr.bf16.mxu0 0
        %477 = vmatpush1.bf16.msra.mxu0 0
        %478 = vmatprep.subr.bf16.mxu0 0
        %479 = vmatpush1.bf16.msra.mxu0 0
        %480 = vmatprep.subr.bf16.mxu0 0
        %481 = vmatpush1.bf16.msra.mxu0 0
        %482 = vmatprep.subr.bf16.mxu0 0
        %483 = vmatpush1.bf16.msra.mxu0 0
        %484 = vmatprep.subr.bf16.mxu0 0
        %485 = vmatpush1.bf16.msra.mxu0 0
        %486 = vmatprep.subr.bf16.mxu0 0
        %487 = vmatpush1.bf16.msra.mxu0 0
        %488 = vmatprep.subr.bf16.mxu0 0
        %489 = vmatpush1.bf16.msra.mxu0 0
        %490 = vmatprep.subr.bf16.mxu0 0
        %491 = vmatpush1.bf16.msra.mxu0 0
        %492 = vmatprep.subr.bf16.mxu0 0
        %493 = vmatpush1.bf16.msra.mxu0 0
        %494 = vmatprep.subr.bf16.mxu0 0
        %495 = vmatpush1.bf16.msra.mxu0 0
        %496 = vmatprep.subr.bf16.mxu0 0
        %497 = vmatpush1.bf16.msra.mxu0 0
        %498 = vmatprep.subr.bf16.mxu0 0
        %499 = vmatpush1.bf16.msra.mxu0 0
        %500 = vmatprep.mubr.bf16.mxu0 0
        %501 = vmatmul.mubr.bf16.gmra.mrb[0].mxu0 %v466
        %v502 = vpop.f32.mrb[0].mxu0
        %v503 = vadd.f32 0.0, %v502
        %v504 = vpop.f32.mrb[0].mxu0
        %v505 = vpop.f32.mrb[0].mxu0
        %v506 = vpop.f32.mrb[0].mxu0
        %507 = vdwg.mxu0
        %v508 = vpack.c.bf16 %v454, %v454
        %v509 = vpack.c.bf16 %v503, %v503
        %v510 = vld [vmem:[%s5] sm:$0x1]
        %v512 = vlaneseq
        %v513 = vshrl.u32 %v512, 7
        %v514 = vsub.s32 0, %v513
        %v515 = vrot.slane %v510, %v514
        %vm517 = vcmask 64512
        %v519 = vsel %vm517, %v508, 0
        %vm521 = vcmask 1043456
        %v523 = vsel %vm521, %v509, 0
        %525 = vmatprep.subr.bf16.mxu0 0
        %526 = vmatpush1.bf16.msra.mxu0 %v523
        %527 = vmatprep.subr.bf16.mxu0 0
        %528 = vmatpush1.bf16.msra.mxu0 0
        %529 = vmatprep.subr.bf16.mxu0 0
        %530 = vmatpush1.bf16.msra.mxu0 0
        %531 = vmatprep.subr.bf16.mxu0 0
        %532 = vmatpush1.bf16.msra.mxu0 0
        %533 = vmatprep.subr.bf16.mxu0 0
        %534 = vmatpush1.bf16.msra.mxu0 0
        %535 = vmatprep.subr.bf16.mxu0 0
        %536 = vmatpush1.bf16.msra.mxu0 0
        %537 = vmatprep.subr.bf16.mxu0 0
        %538 = vmatpush1.bf16.msra.mxu0 0
        %539 = vmatprep.subr.bf16.mxu0 0
        %540 = vmatpush1.bf16.msra.mxu0 0
        %541 = vmatprep.subr.bf16.mxu0 0
        %542 = vmatpush1.bf16.msra.mxu0 0
        %543 = vmatprep.subr.bf16.mxu0 0
        %544 = vmatpush1.bf16.msra.mxu0 0
        %545 = vmatprep.subr.bf16.mxu0 0
        %546 = vmatpush1.bf16.msra.mxu0 0
        %547 = vmatprep.subr.bf16.mxu0 0
        %548 = vmatpush1.bf16.msra.mxu0 0
        %549 = vmatprep.subr.bf16.mxu0 0
        %550 = vmatpush1.bf16.msra.mxu0 0
        %551 = vmatprep.subr.bf16.mxu0 0
        %552 = vmatpush1.bf16.msra.mxu0 0
        %553 = vmatprep.subr.bf16.mxu0 0
        %554 = vmatpush1.bf16.msra.mxu0 0
        %555 = vmatprep.subr.bf16.mxu0 0
        %556 = vmatpush1.bf16.msra.mxu0 0
        %557 = vmatprep.mubr.bf16.mxu0 0
        %558 = vmatmul.mubr.bf16.gmra.mrb[0].mxu0 %v519
        %v559 = vpop.f32.mrb[0].mxu0
        %v560 = vadd.f32 %v515, %v559
        %v561 = vpop.f32.mrb[0].mxu0
        %v562 = vpop.f32.mrb[0].mxu0
        %v563 = vpop.f32.mrb[0].mxu0
        %564 = vdwg.mxu0
        %v565 = vmax.f32 %v560, 0.0
        %v566 = vld [vmem:[%s6] sm:$0xff]
        %v567 = vld [vmem:[%s6 + $0x8] sm:$0xff]
        %v568 = vld [vmem:[%s6 + $0x10] sm:$0xff]
        %v569 = vld [vmem:[%s6 + $0x18] sm:$0xff]
        %v570 = vpack.c.bf16 %v565, %v565
        %v571 = vpack.c.bf16 %v567, %v566
        %v572 = vpack.c.bf16 %v569, %v568
        %v574 = vsel %vm464, %v570, 0
        %576 = vmatprep.subr.bf16.mxu0 0
        %577 = vmatpush1.bf16.msra.mxu0 %v571
        %578 = vmatprep.subr.bf16.mxu0 0
        %579 = vmatpush1.bf16.msra.mxu0 %v572
        %580 = vmatprep.subr.bf16.mxu0 0
        %581 = vmatpush1.bf16.msra.mxu0 0
        %582 = vmatprep.subr.bf16.mxu0 0
        %583 = vmatpush1.bf16.msra.mxu0 0
        %584 = vmatprep.subr.bf16.mxu0 0
        %585 = vmatpush1.bf16.msra.mxu0 0
        %586 = vmatprep.subr.bf16.mxu0 0
        %587 = vmatpush1.bf16.msra.mxu0 0
        %588 = vmatprep.subr.bf16.mxu0 0
        %589 = vmatpush1.bf16.msra.mxu0 0
        %590 = vmatprep.subr.bf16.mxu0 0
        %591 = vmatpush1.bf16.msra.mxu0 0
        %592 = vmatprep.subr.bf16.mxu0 0
        %593 = vmatpush1.bf16.msra.mxu0 0
        %594 = vmatprep.subr.bf16.mxu0 0
        %595 = vmatpush1.bf16.msra.mxu0 0
        %596 = vmatprep.subr.bf16.mxu0 0
        %597 = vmatpush1.bf16.msra.mxu0 0
        %598 = vmatprep.subr.bf16.mxu0 0
        %599 = vmatpush1.bf16.msra.mxu0 0
        %600 = vmatprep.subr.bf16.mxu0 0
        %601 = vmatpush1.bf16.msra.mxu0 0
        %602 = vmatprep.subr.bf16.mxu0 0
        %603 = vmatpush1.bf16.msra.mxu0 0
        %604 = vmatprep.subr.bf16.mxu0 0
        %605 = vmatpush1.bf16.msra.mxu0 0
        %606 = vmatprep.subr.bf16.mxu0 0
        %607 = vmatpush1.bf16.msra.mxu0 0
        %608 = vmatprep.mubr.bf16.mxu0 0
        %609 = vmatmul.mubr.bf16.gmra.mrb[0].mxu0 %v574
        %v610 = vpop.f32.mrb[0].mxu0
        %v611 = vadd.f32 0.0, %v610
        %v612 = vpop.f32.mrb[0].mxu0
        %v613 = vpop.f32.mrb[0].mxu0
        %v614 = vpop.f32.mrb[0].mxu0
        %615 = vdwg.mxu0
        %v616 = vld [vmem:[#allocation5] sm:$0xff]
        %v617 = vld [vmem:[#allocation5 + $0x8] sm:$0xff]
        %v618 = vld [vmem:[#allocation5 + $0x10] sm:$0xff]
        %v619 = vld [vmem:[#allocation5 + $0x18] sm:$0xff]
        %v620 = vpack.c.bf16 %v617, %v616
        %v621 = vpack.c.bf16 %v619, %v618
        %622 = vmatprep.subr.bf16.mxu0 0
        %623 = vmatpush1.bf16.msra.mxu0 %v620
        %624 = vmatprep.subr.bf16.mxu0 0
        %625 = vmatpush1.bf16.msra.mxu0 %v621
        %626 = vmatprep.subr.bf16.mxu0 0
        %627 = vmatpush1.bf16.msra.mxu0 0
        %628 = vmatprep.subr.bf16.mxu0 0
        %629 = vmatpush1.bf16.msra.mxu0 0
        %630 = vmatprep.subr.bf16.mxu0 0
        %631 = vmatpush1.bf16.msra.mxu0 0
        %632 = vmatprep.subr.bf16.mxu0 0
        %633 = vmatpush1.bf16.msra.mxu0 0
        %634 = vmatprep.subr.bf16.mxu0 0
        %635 = vmatpush1.bf16.msra.mxu0 0
        %636 = vmatprep.subr.bf16.mxu0 0
        %637 = vmatpush1.bf16.msra.mxu0 0
        %638 = vmatprep.subr.bf16.mxu0 0
        %639 = vmatpush1.bf16.msra.mxu0 0
        %640 = vmatprep.subr.bf16.mxu0 0
        %641 = vmatpush1.bf16.msra.mxu0 0
        %642 = vmatprep.subr.bf16.mxu0 0
        %643 = vmatpush1.bf16.msra.mxu0 0
        %644 = vmatprep.subr.bf16.mxu0 0
        %645 = vmatpush1.bf16.msra.mxu0 0
        %646 = vmatprep.subr.bf16.mxu0 0
        %647 = vmatpush1.bf16.msra.mxu0 0
        %648 = vmatprep.subr.bf16.mxu0 0
        %649 = vmatpush1.bf16.msra.mxu0 0
        %650 = vmatprep.subr.bf16.mxu0 0
        %651 = vmatpush1.bf16.msra.mxu0 0
        %652 = vmatprep.subr.bf16.mxu0 0
        %653 = vmatpush1.bf16.msra.mxu0 0
        %654 = vmatprep.mubr.bf16.mxu0 0
        %655 = vmatmul.mubr.bf16.gmra.mrb[0].mxu0 %v574
        %v656 = vpop.f32.mrb[0].mxu0
        %v657 = vadd.f32 0.0, %v656
        %v658 = vpop.f32.mrb[0].mxu0
        %v659 = vpop.f32.mrb[0].mxu0
        %v660 = vpop.f32.mrb[0].mxu0
        %661 = vdwg.mxu0
        %v662 = vld [vmem:[#allocation7] sm:$0xff]
        %v663 = vld [vmem:[#allocation7 + $0x8] sm:$0xff]
        %v664 = vld [vmem:[#allocation7 + $0x10] sm:$0xff]
        %v665 = vld [vmem:[#allocation7 + $0x18] sm:$0xff]
        %v666 = vpack.c.bf16 %v663, %v662
        %v667 = vpack.c.bf16 %v665, %v664
        %668 = vmatprep.subr.bf16.mxu0 0
        %669 = vmatpush1.bf16.msra.mxu0 %v666
        %670 = vmatprep.subr.bf16.mxu0 0
        %671 = vmatpush1.bf16.msra.mxu0 %v667
        %672 = vmatprep.subr.bf16.mxu0 0
        %673 = vmatpush1.bf16.msra.mxu0 0
        %674 = vmatprep.subr.bf16.mxu0 0
        %675 = vmatpush1.bf16.msra.mxu0 0
        %676 = vmatprep.subr.bf16.mxu0 0
        %677 = vmatpush1.bf16.msra.mxu0 0
        %678 = vmatprep.subr.bf16.mxu0 0
        %679 = vmatpush1.bf16.msra.mxu0 0
        %680 = vmatprep.subr.bf16.mxu0 0
        %681 = vmatpush1.bf16.msra.mxu0 0
        %682 = vmatprep.subr.bf16.mxu0 0
        %683 = vmatpush1.bf16.msra.mxu0 0
        %684 = vmatprep.subr.bf16.mxu0 0
        %685 = vmatpush1.bf16.msra.mxu0 0
        %686 = vmatprep.subr.bf16.mxu0 0
        %687 = vmatpush1.bf16.msra.mxu0 0
        %688 = vmatprep.subr.bf16.mxu0 0
        %689 = vmatpush1.bf16.msra.mxu0 0
        %690 = vmatprep.subr.bf16.mxu0 0
        %691 = vmatpush1.bf16.msra.mxu0 0
        %692 = vmatprep.subr.bf16.mxu0 0
        %693 = vmatpush1.bf16.msra.mxu0 0
        %694 = vmatprep.subr.bf16.mxu0 0
        %695 = vmatpush1.bf16.msra.mxu0 0
        %696 = vmatprep.subr.bf16.mxu0 0
        %697 = vmatpush1.bf16.msra.mxu0 0
        %698 = vmatprep.subr.bf16.mxu0 0
        %699 = vmatpush1.bf16.msra.mxu0 0
        %700 = vmatprep.mubr.bf16.mxu0 0
        %701 = vmatmul.mubr.bf16.gmra.mrb[0].mxu0 %v574
        %v702 = vpop.f32.mrb[0].mxu0
        %v703 = vadd.f32 0.0, %v702
        %v704 = vpop.f32.mrb[0].mxu0
        %v705 = vpop.f32.mrb[0].mxu0
        %v706 = vpop.f32.mrb[0].mxu0
        %707 = vdwg.mxu0
        %v708 = vld [vmem:[%s9] sm:$0xff]
        %v709 = vld [vmem:[%s9 + $0x8] sm:$0xff]
        %v710 = vld [vmem:[%s9 + $0x10] sm:$0xff]
        %v711 = vld [vmem:[%s9 + $0x18] sm:$0xff]
        %v712 = vld [vmem:[%s9 + $0x20] sm:$0xff]
        %v713 = vld [vmem:[%s9 + $0x28] sm:$0xff]
        %v714 = vld [vmem:[%s9 + $0x30] sm:$0xff]
        %v715 = vld [vmem:[%s9 + $0x38] sm:$0xff]
        %v716 = vld [vmem:[%s9 + $0x40] sm:$0xff]
        %v717 = vld [vmem:[%s9 + $0x48] sm:$0xff]
        %v718 = vld [vmem:[%s9 + $0x50] sm:$0xff]
        %v719 = vld [vmem:[%s9 + $0x58] sm:$0xff]
        %v720 = vld [vmem:[%s9 + $0x60] sm:$0xff]
        %v721 = vld [vmem:[%s9 + $0x68] sm:$0xff]
        %v722 = vld [vmem:[%s9 + $0x70] sm:$0xff]
        %v723 = vld [vmem:[%s9 + $0x78] sm:$0xff]
        %724 = vxpose.xlu0.b32.start [1/16] %v657, 128
        %725 = vxpose.xlu0.b32.cont [2/16] 0.0, 128
        %726 = vxpose.xlu0.b32.cont [3/16] 0.0, 128
        %727 = vxpose.xlu0.b32.cont [4/16] 0.0, 128
        %728 = vxpose.xlu0.b32.cont [5/16] 0.0, 128
        %729 = vxpose.xlu0.b32.cont [6/16] 0.0, 128
        %730 = vxpose.xlu0.b32.cont [7/16] 0.0, 128
        %731 = vxpose.xlu0.b32.cont [8/16] 0.0, 128
        %732 = vxpose.xlu0.b32.cont [9/16] 0.0, 128
        %733 = vxpose.xlu0.b32.cont [10/16] 0.0, 128
        %734 = vxpose.xlu0.b32.cont [11/16] 0.0, 128
        %735 = vxpose.xlu0.b32.cont [12/16] 0.0, 128
        %736 = vxpose.xlu0.b32.cont [13/16] 0.0, 128
        %737 = vxpose.xlu0.b32.cont [14/16] 0.0, 128
        %738 = vxpose.xlu0.b32.cont [15/16] 0.0, 128
        %739 = vxpose.xlu0.b32.end [16/16] 0.0, 128
        %v740 = vpop.trf.xlu0
        %v741 = vpop.trf.xlu0
        %v742 = vpop.trf.xlu0
        %v743 = vpop.trf.xlu0
        %v744 = vpop.trf.xlu0
        %v745 = vpop.trf.xlu0
        %v746 = vpop.trf.xlu0
        %v747 = vpop.trf.xlu0
        %v748 = vpop.trf.xlu0
        %v749 = vpop.trf.xlu0
        %v750 = vpop.trf.xlu0
        %v751 = vpop.trf.xlu0
        %v752 = vpop.trf.xlu0
        %v753 = vpop.trf.xlu0
        %v754 = vpop.trf.xlu0
        %v755 = vpop.trf.xlu0
        %v756 = vpack.c.bf16 %v611, %v611
        %v757 = vpack.c.bf16 %v741, %v740
        %v758 = vpack.c.bf16 %v743, %v742
        %v760 = vsel %vm464, %v756, 0
        %762 = vmatprep.subr.bf16.mxu0 0
        %763 = vmatpush1.bf16.msra.mxu0 %v757
        %764 = vmatprep.subr.bf16.mxu0 0
        %765 = vmatpush1.bf16.msra.mxu0 %v758
        %766 = vmatprep.subr.bf16.mxu0 0
        %767 = vmatpush1.bf16.msra.mxu0 0
        %768 = vmatprep.subr.bf16.mxu0 0
        %769 = vmatpush1.bf16.msra.mxu0 0
        %770 = vmatprep.subr.bf16.mxu0 0
        %771 = vmatpush1.bf16.msra.mxu0 0
        %772 = vmatprep.subr.bf16.mxu0 0
        %773 = vmatpush1.bf16.msra.mxu0 0
        %774 = vmatprep.subr.bf16.mxu0 0
        %775 = vmatpush1.bf16.msra.mxu0 0
        %776 = vmatprep.subr.bf16.mxu0 0
        %777 = vmatpush1.bf16.msra.mxu0 0
        %778 = vmatprep.subr.bf16.mxu0 0
        %779 = vmatpush1.bf16.msra.mxu0 0
        %780 = vmatprep.subr.bf16.mxu0 0
        %781 = vmatpush1.bf16.msra.mxu0 0
        %782 = vmatprep.subr.bf16.mxu0 0
        %783 = vmatpush1.bf16.msra.mxu0 0
        %784 = vmatprep.subr.bf16.mxu0 0
        %785 = vmatpush1.bf16.msra.mxu0 0
        %786 = vmatprep.subr.bf16.mxu0 0
        %787 = vmatpush1.bf16.msra.mxu0 0
        %788 = vmatprep.subr.bf16.mxu0 0
        %789 = vmatpush1.bf16.msra.mxu0 0
        %790 = vmatprep.subr.bf16.mxu0 0
        %791 = vmatpush1.bf16.msra.mxu0 0
        %792 = vmatprep.subr.bf16.mxu0 0
        %793 = vmatpush1.bf16.msra.mxu0 0
        %794 = vmatprep.mubr.bf16.mxu0 0
        %795 = vmatmul.mubr.bf16.gmra.mrb[0].mxu0 %v760
        %v796 = vpop.f32.mrb[0].mxu0
        %v797 = vadd.f32 %v456, %v796
        %v798 = vpop.f32.mrb[0].mxu0
        %v799 = vpop.f32.mrb[0].mxu0
        %v800 = vpop.f32.mrb[0].mxu0
        %801 = vdwg.mxu0
        %vm802 = vcmp.gt.f32.partialorder %v455, 0.0
        %v803 = vsel %vm802, 1, 0
        %v804 = vlaneseq
        %v805 = vshrl.u32 %v804, 7
        %v806 = vsub.s32 0, %v805
        %v807 = vrot.slane %v803, %v806
        %vm808 = vcmp.eq.s32.totalorder %v807, 1
        %v809 = vsel %vm808, %v797, -1e+09
        %v810 = vsel %vm517, %v809, -inf
        %811 = vmax.xlane.f32.xlu0 %v810
        %v812 = vpop.xlane.xlu0 %811
        %v813 = vsub.f32 %v809, %v812
        %v814 = vmul.f32 %v813, 1.442695
        %v815 = vpow.pop %v814
        %v816 = vsel %vm517, %v815, 0.0
        %817 = vadd.xlane.f32.xlu0 %v816
        %v818 = vpop.xlane.xlu0 %817
        %v819 = vrcp.pop %v818
        %v820 = vmul.f32 %v815, %v819
        %v821 = vpack.c.bf16 %v820, %v820
        %v822 = vpack.c.bf16 %v703, %v703
        %v824 = vsel %vm517, %v821, 0
        %v827 = vsel %vm521, %v822, 0
        %829 = vmatprep.subr.bf16.mxu0 0
        %830 = vmatpush1.bf16.msra.mxu0 %v827
        %831 = vmatprep.subr.bf16.mxu0 0
        %832 = vmatpush1.bf16.msra.mxu0 0
        %833 = vmatprep.subr.bf16.mxu0 0
        %834 = vmatpush1.bf16.msra.mxu0 0
        %835 = vmatprep.subr.bf16.mxu0 0
        %836 = vmatpush1.bf16.msra.mxu0 0
        %837 = vmatprep.subr.bf16.mxu0 0
        %838 = vmatpush1.bf16.msra.mxu0 0
        %839 = vmatprep.subr.bf16.mxu0 0
        %840 = vmatpush1.bf16.msra.mxu0 0
        %841 = vmatprep.subr.bf16.mxu0 0
        %842 = vmatpush1.bf16.msra.mxu0 0
        %843 = vmatprep.subr.bf16.mxu0 0
        %844 = vmatpush1.bf16.msra.mxu0 0
        %845 = vmatprep.subr.bf16.mxu0 0
        %846 = vmatpush1.bf16.msra.mxu0 0
        %847 = vmatprep.subr.bf16.mxu0 0
        %848 = vmatpush1.bf16.msra.mxu0 0
        %849 = vmatprep.subr.bf16.mxu0 0
        %850 = vmatpush1.bf16.msra.mxu0 0
        %851 = vmatprep.subr.bf16.mxu0 0
        %852 = vmatpush1.bf16.msra.mxu0 0
        %853 = vmatprep.subr.bf16.mxu0 0
        %854 = vmatpush1.bf16.msra.mxu0 0
        %855 = vmatprep.subr.bf16.mxu0 0
        %856 = vmatpush1.bf16.msra.mxu0 0
        %857 = vmatprep.subr.bf16.mxu0 0
        %858 = vmatpush1.bf16.msra.mxu0 0
        %859 = vmatprep.subr.bf16.mxu0 0
        %860 = vmatpush1.bf16.msra.mxu0 0
        %861 = vmatprep.mubr.bf16.mxu0 0
        %862 = vmatmul.mubr.bf16.gmra.mrb[0].mxu0 %v824
        %v863 = vpop.f32.mrb[0].mxu0
        %v864 = vadd.f32 0.0, %v863
        %v865 = vpop.f32.mrb[0].mxu0
        %v866 = vpop.f32.mrb[0].mxu0
        %v867 = vpop.f32.mrb[0].mxu0
        %868 = vdwg.mxu0
        %v869 = vpack.c.bf16 %v864, %v864
        %v870 = vpack.c.bf16 %v709, %v708
        %v871 = vpack.c.bf16 %v711, %v710
        %v873 = vsel %vm464, %v869, 0
        %875 = vmatprep.subr.bf16.mxu0 0
        %876 = vmatpush1.bf16.msra.mxu0 %v870
        %877 = vmatprep.subr.bf16.mxu0 0
        %878 = vmatpush1.bf16.msra.mxu0 %v871
        %879 = vmatprep.subr.bf16.mxu0 0
        %880 = vmatpush1.bf16.msra.mxu0 0
        %881 = vmatprep.subr.bf16.mxu0 0
        %882 = vmatpush1.bf16.msra.mxu0 0
        %883 = vmatprep.subr.bf16.mxu0 0
        %884 = vmatpush1.bf16.msra.mxu0 0
        %885 = vmatprep.subr.bf16.mxu0 0
        %886 = vmatpush1.bf16.msra.mxu0 0
        %887 = vmatprep.subr.bf16.mxu0 0
        %888 = vmatpush1.bf16.msra.mxu0 0
        %889 = vmatprep.subr.bf16.mxu0 0
        %890 = vmatpush1.bf16.msra.mxu0 0
        %891 = vmatprep.subr.bf16.mxu0 0
        %892 = vmatpush1.bf16.msra.mxu0 0
        %893 = vmatprep.subr.bf16.mxu0 0
        %894 = vmatpush1.bf16.msra.mxu0 0
        %895 = vmatprep.subr.bf16.mxu0 0
        %896 = vmatpush1.bf16.msra.mxu0 0
        %897 = vmatprep.subr.bf16.mxu0 0
        %898 = vmatpush1.bf16.msra.mxu0 0
        %899 = vmatprep.subr.bf16.mxu0 0
        %900 = vmatpush1.bf16.msra.mxu0 0
        %901 = vmatprep.subr.bf16.mxu0 0
        %902 = vmatpush1.bf16.msra.mxu0 0
        %903 = vmatprep.subr.bf16.mxu0 0
        %904 = vmatpush1.bf16.msra.mxu0 0
        %905 = vmatprep.subr.bf16.mxu0 0
        %906 = vmatpush1.bf16.msra.mxu0 0
        %907 = vmatprep.mubr.bf16.mxu0 0
        %908 = vmatmul.mubr.bf16.gmra.mrb[0].mxu0 %v873
        %v909 = vpop.f32.mrb[0].mxu0
        %v910 = vadd.f32 0.0, %v909
        %v911 = vpop.f32.mrb[0].mxu0
        %v912 = vpop.f32.mrb[0].mxu0
        %v913 = vpop.f32.mrb[0].mxu0
        %914 = vdwg.mxu0
        %v915 = vadd.f32 %v565, %v910
        %917 = vrot.lane.b32.xlu0 %v657, 96
        %v918 = vpop.permute.xlu0 %917
        %920 = vxpose.xlu0.b32.start [1/16] %v918, 128
        %921 = vxpose.xlu0.b32.cont [2/16] 0.0, 128
        %922 = vxpose.xlu0.b32.cont [3/16] 0.0, 128
        %923 = vxpose.xlu0.b32.cont [4/16] 0.0, 128
        %924 = vxpose.xlu0.b32.cont [5/16] 0.0, 128
        %925 = vxpose.xlu0.b32.cont [6/16] 0.0, 128
        %926 = vxpose.xlu0.b32.cont [7/16] 0.0, 128
        %927 = vxpose.xlu0.b32.cont [8/16] 0.0, 128
        %928 = vxpose.xlu0.b32.cont [9/16] 0.0, 128
        %929 = vxpose.xlu0.b32.cont [10/16] 0.0, 128
        %930 = vxpose.xlu0.b32.cont [11/16] 0.0, 128
        %931 = vxpose.xlu0.b32.cont [12/16] 0.0, 128
        %932 = vxpose.xlu0.b32.cont [13/16] 0.0, 128
        %933 = vxpose.xlu0.b32.cont [14/16] 0.0, 128
        %934 = vxpose.xlu0.b32.cont [15/16] 0.0, 128
        %935 = vxpose.xlu0.b32.end [16/16] 0.0, 128
        %v936 = vpop.trf.xlu0
        %v937 = vpop.trf.xlu0
        %v938 = vpop.trf.xlu0
        %v939 = vpop.trf.xlu0
        %v940 = vpop.trf.xlu0
        %v941 = vpop.trf.xlu0
        %v942 = vpop.trf.xlu0
        %v943 = vpop.trf.xlu0
        %v944 = vpop.trf.xlu0
        %v945 = vpop.trf.xlu0
        %v946 = vpop.trf.xlu0
        %v947 = vpop.trf.xlu0
        %v948 = vpop.trf.xlu0
        %v949 = vpop.trf.xlu0
        %v950 = vpop.trf.xlu0
        %v951 = vpop.trf.xlu0
        %v952 = vpack.c.bf16 %v937, %v936
        %v953 = vpack.c.bf16 %v939, %v938
        %955 = vrot.lane.b32.xlu0 %v756, 96
        %v956 = vpop.permute.xlu0 %955
        %v958 = vsel %vm464, %v956, 0
        %960 = vmatprep.subr.bf16.mxu0 0
        %961 = vmatpush1.bf16.msra.mxu0 %v952
        %962 = vmatprep.subr.bf16.mxu0 0
        %963 = vmatpush1.bf16.msra.mxu0 %v953
        %964 = vmatprep.subr.bf16.mxu0 0
        %965 = vmatpush1.bf16.msra.mxu0 0
        %966 = vmatprep.subr.bf16.mxu0 0
        %967 = vmatpush1.bf16.msra.mxu0 0
        %968 = vmatprep.subr.bf16.mxu0 0
        %969 = vmatpush1.bf16.msra.mxu0 0
        %970 = vmatprep.subr.bf16.mxu0 0
        %971 = vmatpush1.bf16.msra.mxu0 0
        %972 = vmatprep.subr.bf16.mxu0 0
        %973 = vmatpush1.bf16.msra.mxu0 0
        %974 = vmatprep.subr.bf16.mxu0 0
        %975 = vmatpush1.bf16.msra.mxu0 0
        %976 = vmatprep.subr.bf16.mxu0 0
        %977 = vmatpush1.bf16.msra.mxu0 0
        %978 = vmatprep.subr.bf16.mxu0 0
        %979 = vmatpush1.bf16.msra.mxu0 0
        %980 = vmatprep.subr.bf16.mxu0 0
        %981 = vmatpush1.bf16.msra.mxu0 0
        %982 = vmatprep.subr.bf16.mxu0 0
        %983 = vmatpush1.bf16.msra.mxu0 0
        %984 = vmatprep.subr.bf16.mxu0 0
        %985 = vmatpush1.bf16.msra.mxu0 0
        %986 = vmatprep.subr.bf16.mxu0 0
        %987 = vmatpush1.bf16.msra.mxu0 0
        %988 = vmatprep.subr.bf16.mxu0 0
        %989 = vmatpush1.bf16.msra.mxu0 0
        %990 = vmatprep.subr.bf16.mxu0 0
        %991 = vmatpush1.bf16.msra.mxu0 0
        %992 = vmatprep.mubr.bf16.mxu0 0
        %993 = vmatmul.mubr.bf16.gmra.mrb[0].mxu0 %v958
        %v994 = vpop.f32.mrb[0].mxu0
        %v995 = vadd.f32 %v456, %v994
        %v996 = vpop.f32.mrb[0].mxu0
        %v997 = vpop.f32.mrb[0].mxu0
        %v998 = vpop.f32.mrb[0].mxu0
        %999 = vdwg.mxu0
        %v1000 = vsel %vm808, %v995, -1e+09
        %v1001 = vsel %vm517, %v1000, -inf
        %1002 = vmax.xlane.f32.xlu0 %v1001
        %v1003 = vpop.xlane.xlu0 %1002
        %v1004 = vsub.f32 %v1000, %v1003
        %v1005 = vmul.f32 %v1004, 1.442695
        %v1006 = vpow.pop %v1005
        %v1007 = vsel %vm517, %v1006, 0.0
        %1008 = vadd.xlane.f32.xlu0 %v1007
        %v1009 = vpop.xlane.xlu0 %1008
        %v1010 = vrcp.pop %v1009
        %v1011 = vmul.f32 %v1006, %v1010
        %v1012 = vpack.c.bf16 %v1011, %v1011
        %1014 = vrot.lane.b32.xlu0 %v822, 96
        %v1015 = vpop.permute.xlu0 %1014
        %v1017 = vsel %vm517, %v1012, 0
        %v1020 = vsel %vm521, %v1015, 0
        %1022 = vmatprep.subr.bf16.mxu0 0
        %1023 = vmatpush1.bf16.msra.mxu0 %v1020
        %1024 = vmatprep.subr.bf16.mxu0 0
        %1025 = vmatpush1.bf16.msra.mxu0 0
        %1026 = vmatprep.subr.bf16.mxu0 0
        %1027 = vmatpush1.bf16.msra.mxu0 0
        %1028 = vmatprep.subr.bf16.mxu0 0
        %1029 = vmatpush1.bf16.msra.mxu0 0
        %1030 = vmatprep.subr.bf16.mxu0 0
        %1031 = vmatpush1.bf16.msra.mxu0 0
        %1032 = vmatprep.subr.bf16.mxu0 0
        %1033 = vmatpush1.bf16.msra.mxu0 0
        %1034 = vmatprep.subr.bf16.mxu0 0
        %1035 = vmatpush1.bf16.msra.mxu0 0
        %1036 = vmatprep.subr.bf16.mxu0 0
        %1037 = vmatpush1.bf16.msra.mxu0 0
        %1038 = vmatprep.subr.bf16.mxu0 0
        %1039 = vmatpush1.bf16.msra.mxu0 0
        %1040 = vmatprep.subr.bf16.mxu0 0
        %1041 = vmatpush1.bf16.msra.mxu0 0
        %1042 = vmatprep.subr.bf16.mxu0 0
        %1043 = vmatpush1.bf16.msra.mxu0 0
        %1044 = vmatprep.subr.bf16.mxu0 0
        %1045 = vmatpush1.bf16.msra.mxu0 0
        %1046 = vmatprep.subr.bf16.mxu0 0
        %1047 = vmatpush1.bf16.msra.mxu0 0
        %1048 = vmatprep.subr.bf16.mxu0 0
        %1049 = vmatpush1.bf16.msra.mxu0 0
        %1050 = vmatprep.subr.bf16.mxu0 0
        %1051 = vmatpush1.bf16.msra.mxu0 0
        %1052 = vmatprep.subr.bf16.mxu0 0
        %1053 = vmatpush1.bf16.msra.mxu0 0
        %1054 = vmatprep.mubr.bf16.mxu0 0
        %1055 = vmatmul.mubr.bf16.gmra.mrb[0].mxu0 %v1017
        %v1056 = vpop.f32.mrb[0].mxu0
        %v1057 = vadd.f32 0.0, %v1056
        %v1058 = vpop.f32.mrb[0].mxu0
        %v1059 = vpop.f32.mrb[0].mxu0
        %v1060 = vpop.f32.mrb[0].mxu0
        %1061 = vdwg.mxu0
        %v1062 = vpack.c.bf16 %v1057, %v1057
        %v1063 = vpack.c.bf16 %v713, %v712
        %v1064 = vpack.c.bf16 %v715, %v714
        %v1066 = vsel %vm464, %v1062, 0
        %1068 = vmatprep.subr.bf16.mxu0 0
        %1069 = vmatpush1.bf16.msra.mxu0 %v1063
        %1070 = vmatprep.subr.bf16.mxu0 0
        %1071 = vmatpush1.bf16.msra.mxu0 %v1064
        %1072 = vmatprep.subr.bf16.mxu0 0
        %1073 = vmatpush1.bf16.msra.mxu0 0
        %1074 = vmatprep.subr.bf16.mxu0 0
        %1075 = vmatpush1.bf16.msra.mxu0 0
        %1076 = vmatprep.subr.bf16.mxu0 0
        %1077 = vmatpush1.bf16.msra.mxu0 0
        %1078 = vmatprep.subr.bf16.mxu0 0
        %1079 = vmatpush1.bf16.msra.mxu0 0
        %1080 = vmatprep.subr.bf16.mxu0 0
        %1081 = vmatpush1.bf16.msra.mxu0 0
        %1082 = vmatprep.subr.bf16.mxu0 0
        %1083 = vmatpush1.bf16.msra.mxu0 0
        %1084 = vmatprep.subr.bf16.mxu0 0
        %1085 = vmatpush1.bf16.msra.mxu0 0
        %1086 = vmatprep.subr.bf16.mxu0 0
        %1087 = vmatpush1.bf16.msra.mxu0 0
        %1088 = vmatprep.subr.bf16.mxu0 0
        %1089 = vmatpush1.bf16.msra.mxu0 0
        %1090 = vmatprep.subr.bf16.mxu0 0
        %1091 = vmatpush1.bf16.msra.mxu0 0
        %1092 = vmatprep.subr.bf16.mxu0 0
        %1093 = vmatpush1.bf16.msra.mxu0 0
        %1094 = vmatprep.subr.bf16.mxu0 0
        %1095 = vmatpush1.bf16.msra.mxu0 0
        %1096 = vmatprep.subr.bf16.mxu0 0
        %1097 = vmatpush1.bf16.msra.mxu0 0
        %1098 = vmatprep.subr.bf16.mxu0 0
        %1099 = vmatpush1.bf16.msra.mxu0 0
        %1100 = vmatprep.mubr.bf16.mxu0 0
        %1101 = vmatmul.mubr.bf16.gmra.mrb[0].mxu0 %v1066
        %v1102 = vpop.f32.mrb[0].mxu0
        %v1103 = vadd.f32 0.0, %v1102
        %v1104 = vpop.f32.mrb[0].mxu0
        %v1105 = vpop.f32.mrb[0].mxu0
        %v1106 = vpop.f32.mrb[0].mxu0
        %1107 = vdwg.mxu0
        %v1108 = vadd.f32 %v915, %v1103
        %1109 = vrot.lane.b32.xlu0 %v657, 64
        %v1110 = vpop.permute.xlu0 %1109
        %1112 = vxpose.xlu0.b32.start [1/16] %v1110, 128
        %1113 = vxpose.xlu0.b32.cont [2/16] 0.0, 128
        %1114 = vxpose.xlu0.b32.cont [3/16] 0.0, 128
        %1115 = vxpose.xlu0.b32.cont [4/16] 0.0, 128
        %1116 = vxpose.xlu0.b32.cont [5/16] 0.0, 128
        %1117 = vxpose.xlu0.b32.cont [6/16] 0.0, 128
        %1118 = vxpose.xlu0.b32.cont [7/16] 0.0, 128
        %1119 = vxpose.xlu0.b32.cont [8/16] 0.0, 128
        %1120 = vxpose.xlu0.b32.cont [9/16] 0.0, 128
        %1121 = vxpose.xlu0.b32.cont [10/16] 0.0, 128
        %1122 = vxpose.xlu0.b32.cont [11/16] 0.0, 128
        %1123 = vxpose.xlu0.b32.cont [12/16] 0.0, 128
        %1124 = vxpose.xlu0.b32.cont [13/16] 0.0, 128
        %1125 = vxpose.xlu0.b32.cont [14/16] 0.0, 128
        %1126 = vxpose.xlu0.b32.cont [15/16] 0.0, 128
        %1127 = vxpose.xlu0.b32.end [16/16] 0.0, 128
        %v1128 = vpop.trf.xlu0
        %v1129 = vpop.trf.xlu0
        %v1130 = vpop.trf.xlu0
        %v1131 = vpop.trf.xlu0
        %v1132 = vpop.trf.xlu0
        %v1133 = vpop.trf.xlu0
        %v1134 = vpop.trf.xlu0
        %v1135 = vpop.trf.xlu0
        %v1136 = vpop.trf.xlu0
        %v1137 = vpop.trf.xlu0
        %v1138 = vpop.trf.xlu0
        %v1139 = vpop.trf.xlu0
        %v1140 = vpop.trf.xlu0
        %v1141 = vpop.trf.xlu0
        %v1142 = vpop.trf.xlu0
        %v1143 = vpop.trf.xlu0
        %v1144 = vpack.c.bf16 %v1129, %v1128
        %v1145 = vpack.c.bf16 %v1131, %v1130
        %1146 = vrot.lane.b32.xlu0 %v756, 64
        %v1147 = vpop.permute.xlu0 %1146
        %v1149 = vsel %vm464, %v1147, 0
        %1151 = vmatprep.subr.bf16.mxu0 0
        %1152 = vmatpush1.bf16.msra.mxu0 %v1144
        %1153 = vmatprep.subr.bf16.mxu0 0
        %1154 = vmatpush1.bf16.msra.mxu0 %v1145
        %1155 = vmatprep.subr.bf16.mxu0 0
        %1156 = vmatpush1.bf16.msra.mxu0 0
        %1157 = vmatprep.subr.bf16.mxu0 0
        %1158 = vmatpush1.bf16.msra.mxu0 0
        %1159 = vmatprep.subr.bf16.mxu0 0
        %1160 = vmatpush1.bf16.msra.mxu0 0
        %1161 = vmatprep.subr.bf16.mxu0 0
        %1162 = vmatpush1.bf16.msra.mxu0 0
        %1163 = vmatprep.subr.bf16.mxu0 0
        %1164 = vmatpush1.bf16.msra.mxu0 0
        %1165 = vmatprep.subr.bf16.mxu0 0
        %1166 = vmatpush1.bf16.msra.mxu0 0
        %1167 = vmatprep.subr.bf16.mxu0 0
        %1168 = vmatpush1.bf16.msra.mxu0 0
        %1169 = vmatprep.subr.bf16.mxu0 0
        %1170 = vmatpush1.bf16.msra.mxu0 0
        %1171 = vmatprep.subr.bf16.mxu0 0
        %1172 = vmatpush1.bf16.msra.mxu0 0
        %1173 = vmatprep.subr.bf16.mxu0 0
        %1174 = vmatpush1.bf16.msra.mxu0 0
        %1175 = vmatprep.subr.bf16.mxu0 0
        %1176 = vmatpush1.bf16.msra.mxu0 0
        %1177 = vmatprep.subr.bf16.mxu0 0
        %1178 = vmatpush1.bf16.msra.mxu0 0
        %1179 = vmatprep.subr.bf16.mxu0 0
        %1180 = vmatpush1.bf16.msra.mxu0 0
        %1181 = vmatprep.subr.bf16.mxu0 0
        %1182 = vmatpush1.bf16.msra.mxu0 0
        %1183 = vmatprep.mubr.bf16.mxu0 0
        %1184 = vmatmul.mubr.bf16.gmra.mrb[0].mxu0 %v1149
        %v1185 = vpop.f32.mrb[0].mxu0
        %v1186 = vadd.f32 %v456, %v1185
        %v1187 = vpop.f32.mrb[0].mxu0
        %v1188 = vpop.f32.mrb[0].mxu0
        %v1189 = vpop.f32.mrb[0].mxu0
        %1190 = vdwg.mxu0
        %v1191 = vsel %vm808, %v1186, -1e+09
        %v1192 = vsel %vm517, %v1191, -inf
        %1193 = vmax.xlane.f32.xlu0 %v1192
        %v1194 = vpop.xlane.xlu0 %1193
        %v1195 = vsub.f32 %v1191, %v1194
        %v1196 = vmul.f32 %v1195, 1.442695
        %v1197 = vpow.pop %v1196
        %v1198 = vsel %vm517, %v1197, 0.0
        %1199 = vadd.xlane.f32.xlu0 %v1198
        %v1200 = vpop.xlane.xlu0 %1199
        %v1201 = vrcp.pop %v1200
        %v1202 = vmul.f32 %v1197, %v1201
        %v1203 = vpack.c.bf16 %v1202, %v1202
        %1204 = vrot.lane.b32.xlu0 %v822, 64
        %v1205 = vpop.permute.xlu0 %1204
        %v1207 = vsel %vm517, %v1203, 0
        %v1210 = vsel %vm521, %v1205, 0
        %1212 = vmatprep.subr.bf16.mxu0 0
        %1213 = vmatpush1.bf16.msra.mxu0 %v1210
        %1214 = vmatprep.subr.bf16.mxu0 0
        %1215 = vmatpush1.bf16.msra.mxu0 0
        %1216 = vmatprep.subr.bf16.mxu0 0
        %1217 = vmatpush1.bf16.msra.mxu0 0
        %1218 = vmatprep.subr.bf16.mxu0 0
        %1219 = vmatpush1.bf16.msra.mxu0 0
        %1220 = vmatprep.subr.bf16.mxu0 0
        %1221 = vmatpush1.bf16.msra.mxu0 0
        %1222 = vmatprep.subr.bf16.mxu0 0
        %1223 = vmatpush1.bf16.msra.mxu0 0
        %1224 = vmatprep.subr.bf16.mxu0 0
        %1225 = vmatpush1.bf16.msra.mxu0 0
        %1226 = vmatprep.subr.bf16.mxu0 0
        %1227 = vmatpush1.bf16.msra.mxu0 0
        %1228 = vmatprep.subr.bf16.mxu0 0
        %1229 = vmatpush1.bf16.msra.mxu0 0
        %1230 = vmatprep.subr.bf16.mxu0 0
        %1231 = vmatpush1.bf16.msra.mxu0 0
        %1232 = vmatprep.subr.bf16.mxu0 0
        %1233 = vmatpush1.bf16.msra.mxu0 0
        %1234 = vmatprep.subr.bf16.mxu0 0
        %1235 = vmatpush1.bf16.msra.mxu0 0
        %1236 = vmatprep.subr.bf16.mxu0 0
        %1237 = vmatpush1.bf16.msra.mxu0 0
        %1238 = vmatprep.subr.bf16.mxu0 0
        %1239 = vmatpush1.bf16.msra.mxu0 0
        %1240 = vmatprep.subr.bf16.mxu0 0
        %1241 = vmatpush1.bf16.msra.mxu0 0
        %1242 = vmatprep.subr.bf16.mxu0 0
        %1243 = vmatpush1.bf16.msra.mxu0 0
        %1244 = vmatprep.mubr.bf16.mxu0 0
        %1245 = vmatmul.mubr.bf16.gmra.mrb[0].mxu0 %v1207
        %v1246 = vpop.f32.mrb[0].mxu0
        %v1247 = vadd.f32 0.0, %v1246
        %v1248 = vpop.f32.mrb[0].mxu0
        %v1249 = vpop.f32.mrb[0].mxu0
        %v1250 = vpop.f32.mrb[0].mxu0
        %1251 = vdwg.mxu0
        %v1252 = vpack.c.bf16 %v1247, %v1247
        %v1253 = vpack.c.bf16 %v717, %v716
        %v1254 = vpack.c.bf16 %v719, %v718
        %v1256 = vsel %vm464, %v1252, 0
        %1258 = vmatprep.subr.bf16.mxu0 0
        %1259 = vmatpush1.bf16.msra.mxu0 %v1253
        %1260 = vmatprep.subr.bf16.mxu0 0
        %1261 = vmatpush1.bf16.msra.mxu0 %v1254
        %1262 = vmatprep.subr.bf16.mxu0 0
        %1263 = vmatpush1.bf16.msra.mxu0 0
        %1264 = vmatprep.subr.bf16.mxu0 0
        %1265 = vmatpush1.bf16.msra.mxu0 0
        %1266 = vmatprep.subr.bf16.mxu0 0
        %1267 = vmatpush1.bf16.msra.mxu0 0
        %1268 = vmatprep.subr.bf16.mxu0 0
        %1269 = vmatpush1.bf16.msra.mxu0 0
        %1270 = vmatprep.subr.bf16.mxu0 0
        %1271 = vmatpush1.bf16.msra.mxu0 0
        %1272 = vmatprep.subr.bf16.mxu0 0
        %1273 = vmatpush1.bf16.msra.mxu0 0
        %1274 = vmatprep.subr.bf16.mxu0 0
        %1275 = vmatpush1.bf16.msra.mxu0 0
        %1276 = vmatprep.subr.bf16.mxu0 0
        %1277 = vmatpush1.bf16.msra.mxu0 0
        %1278 = vmatprep.subr.bf16.mxu0 0
        %1279 = vmatpush1.bf16.msra.mxu0 0
        %1280 = vmatprep.subr.bf16.mxu0 0
        %1281 = vmatpush1.bf16.msra.mxu0 0
        %1282 = vmatprep.subr.bf16.mxu0 0
        %1283 = vmatpush1.bf16.msra.mxu0 0
        %1284 = vmatprep.subr.bf16.mxu0 0
        %1285 = vmatpush1.bf16.msra.mxu0 0
        %1286 = vmatprep.subr.bf16.mxu0 0
        %1287 = vmatpush1.bf16.msra.mxu0 0
        %1288 = vmatprep.subr.bf16.mxu0 0
        %1289 = vmatpush1.bf16.msra.mxu0 0
        %1290 = vmatprep.mubr.bf16.mxu0 0
        %1291 = vmatmul.mubr.bf16.gmra.mrb[0].mxu0 %v1256
        %v1292 = vpop.f32.mrb[0].mxu0
        %v1293 = vadd.f32 0.0, %v1292
        %v1294 = vpop.f32.mrb[0].mxu0
        %v1295 = vpop.f32.mrb[0].mxu0
        %v1296 = vpop.f32.mrb[0].mxu0
        %1297 = vdwg.mxu0
        %v1298 = vadd.f32 %v1108, %v1293
        %1299 = vrot.lane.b32.xlu0 %v657, 32
        %v1300 = vpop.permute.xlu0 %1299
        %1302 = vxpose.xlu0.b32.start [1/16] %v1300, 128
        %1303 = vxpose.xlu0.b32.cont [2/16] 0.0, 128
        %1304 = vxpose.xlu0.b32.cont [3/16] 0.0, 128
        %1305 = vxpose.xlu0.b32.cont [4/16] 0.0, 128
        %1306 = vxpose.xlu0.b32.cont [5/16] 0.0, 128
        %1307 = vxpose.xlu0.b32.cont [6/16] 0.0, 128
        %1308 = vxpose.xlu0.b32.cont [7/16] 0.0, 128
        %1309 = vxpose.xlu0.b32.cont [8/16] 0.0, 128
        %1310 = vxpose.xlu0.b32.cont [9/16] 0.0, 128
        %1311 = vxpose.xlu0.b32.cont [10/16] 0.0, 128
        %1312 = vxpose.xlu0.b32.cont [11/16] 0.0, 128
        %1313 = vxpose.xlu0.b32.cont [12/16] 0.0, 128
        %1314 = vxpose.xlu0.b32.cont [13/16] 0.0, 128
        %1315 = vxpose.xlu0.b32.cont [14/16] 0.0, 128
        %1316 = vxpose.xlu0.b32.cont [15/16] 0.0, 128
        %1317 = vxpose.xlu0.b32.end [16/16] 0.0, 128
        %v1318 = vpop.trf.xlu0
        %v1319 = vpop.trf.xlu0
        %v1320 = vpop.trf.xlu0
        %v1321 = vpop.trf.xlu0
        %v1322 = vpop.trf.xlu0
        %v1323 = vpop.trf.xlu0
        %v1324 = vpop.trf.xlu0
        %v1325 = vpop.trf.xlu0
        %v1326 = vpop.trf.xlu0
        %v1327 = vpop.trf.xlu0
        %v1328 = vpop.trf.xlu0
        %v1329 = vpop.trf.xlu0
        %v1330 = vpop.trf.xlu0
        %v1331 = vpop.trf.xlu0
        %v1332 = vpop.trf.xlu0
        %v1333 = vpop.trf.xlu0
        %v1334 = vpack.c.bf16 %v1319, %v1318
        %v1335 = vpack.c.bf16 %v1321, %v1320
        %1336 = vrot.lane.b32.xlu0 %v756, 32
        %v1337 = vpop.permute.xlu0 %1336
        %v1339 = vsel %vm464, %v1337, 0
        %1341 = vmatprep.subr.bf16.mxu0 0
        %1342 = vmatpush1.bf16.msra.mxu0 %v1334
        %1343 = vmatprep.subr.bf16.mxu0 0
        %1344 = vmatpush1.bf16.msra.mxu0 %v1335
        %1345 = vmatprep.subr.bf16.mxu0 0
        %1346 = vmatpush1.bf16.msra.mxu0 0
        %1347 = vmatprep.subr.bf16.mxu0 0
        %1348 = vmatpush1.bf16.msra.mxu0 0
        %1349 = vmatprep.subr.bf16.mxu0 0
        %1350 = vmatpush1.bf16.msra.mxu0 0
        %1351 = vmatprep.subr.bf16.mxu0 0
        %1352 = vmatpush1.bf16.msra.mxu0 0
        %1353 = vmatprep.subr.bf16.mxu0 0
        %1354 = vmatpush1.bf16.msra.mxu0 0
        %1355 = vmatprep.subr.bf16.mxu0 0
        %1356 = vmatpush1.bf16.msra.mxu0 0
        %1357 = vmatprep.subr.bf16.mxu0 0
        %1358 = vmatpush1.bf16.msra.mxu0 0
        %1359 = vmatprep.subr.bf16.mxu0 0
        %1360 = vmatpush1.bf16.msra.mxu0 0
        %1361 = vmatprep.subr.bf16.mxu0 0
        %1362 = vmatpush1.bf16.msra.mxu0 0
        %1363 = vmatprep.subr.bf16.mxu0 0
        %1364 = vmatpush1.bf16.msra.mxu0 0
        %1365 = vmatprep.subr.bf16.mxu0 0
        %1366 = vmatpush1.bf16.msra.mxu0 0
        %1367 = vmatprep.subr.bf16.mxu0 0
        %1368 = vmatpush1.bf16.msra.mxu0 0
        %1369 = vmatprep.subr.bf16.mxu0 0
        %1370 = vmatpush1.bf16.msra.mxu0 0
        %1371 = vmatprep.subr.bf16.mxu0 0
        %1372 = vmatpush1.bf16.msra.mxu0 0
        %1373 = vmatprep.mubr.bf16.mxu0 0
        %1374 = vmatmul.mubr.bf16.gmra.mrb[0].mxu0 %v1339
        %v1375 = vpop.f32.mrb[0].mxu0
        %v1376 = vadd.f32 %v456, %v1375
        %v1377 = vpop.f32.mrb[0].mxu0
        %v1378 = vpop.f32.mrb[0].mxu0
        %v1379 = vpop.f32.mrb[0].mxu0
        %1380 = vdwg.mxu0
        %v1381 = vsel %vm808, %v1376, -1e+09
        %v1382 = vsel %vm517, %v1381, -inf
        %1383 = vmax.xlane.f32.xlu0 %v1382
        %v1384 = vpop.xlane.xlu0 %1383
        %v1385 = vsub.f32 %v1381, %v1384
        %v1386 = vmul.f32 %v1385, 1.442695
        %v1387 = vpow.pop %v1386
        %v1388 = vsel %vm517, %v1387, 0.0
        %1389 = vadd.xlane.f32.xlu0 %v1388
        %v1390 = vpop.xlane.xlu0 %1389
        %v1391 = vrcp.pop %v1390
        %v1392 = vmul.f32 %v1387, %v1391
        %v1393 = vpack.c.bf16 %v1392, %v1392
        %1394 = vrot.lane.b32.xlu0 %v822, 32
        %v1395 = vpop.permute.xlu0 %1394
        %v1397 = vsel %vm517, %v1393, 0
        %v1400 = vsel %vm521, %v1395, 0
        %1402 = vmatprep.subr.bf16.mxu0 0
        %1403 = vmatpush1.bf16.msra.mxu0 %v1400
        %1404 = vmatprep.subr.bf16.mxu0 0
        %1405 = vmatpush1.bf16.msra.mxu0 0
        %1406 = vmatprep.subr.bf16.mxu0 0
        %1407 = vmatpush1.bf16.msra.mxu0 0
        %1408 = vmatprep.subr.bf16.mxu0 0
        %1409 = vmatpush1.bf16.msra.mxu0 0
        %1410 = vmatprep.subr.bf16.mxu0 0
        %1411 = vmatpush1.bf16.msra.mxu0 0
        %1412 = vmatprep.subr.bf16.mxu0 0
        %1413 = vmatpush1.bf16.msra.mxu0 0
        %1414 = vmatprep.subr.bf16.mxu0 0
        %1415 = vmatpush1.bf16.msra.mxu0 0
        %1416 = vmatprep.subr.bf16.mxu0 0
        %1417 = vmatpush1.bf16.msra.mxu0 0
        %1418 = vmatprep.subr.bf16.mxu0 0
        %1419 = vmatpush1.bf16.msra.mxu0 0
        %1420 = vmatprep.subr.bf16.mxu0 0
        %1421 = vmatpush1.bf16.msra.mxu0 0
        %1422 = vmatprep.subr.bf16.mxu0 0
        %1423 = vmatpush1.bf16.msra.mxu0 0
        %1424 = vmatprep.subr.bf16.mxu0 0
        %1425 = vmatpush1.bf16.msra.mxu0 0
        %1426 = vmatprep.subr.bf16.mxu0 0
        %1427 = vmatpush1.bf16.msra.mxu0 0
        %1428 = vmatprep.subr.bf16.mxu0 0
        %1429 = vmatpush1.bf16.msra.mxu0 0
        %1430 = vmatprep.subr.bf16.mxu0 0
        %1431 = vmatpush1.bf16.msra.mxu0 0
        %1432 = vmatprep.subr.bf16.mxu0 0
        %1433 = vmatpush1.bf16.msra.mxu0 0
        %1434 = vmatprep.mubr.bf16.mxu0 0
        %1435 = vmatmul.mubr.bf16.gmra.mrb[0].mxu0 %v1397
        %v1436 = vpop.f32.mrb[0].mxu0
        %v1437 = vadd.f32 0.0, %v1436
        %v1438 = vpop.f32.mrb[0].mxu0
        %v1439 = vpop.f32.mrb[0].mxu0
        %v1440 = vpop.f32.mrb[0].mxu0
        %1441 = vdwg.mxu0
        %v1442 = vpack.c.bf16 %v1437, %v1437
        %v1443 = vpack.c.bf16 %v721, %v720
        %v1444 = vpack.c.bf16 %v723, %v722
        %v1446 = vsel %vm464, %v1442, 0
        %1448 = vmatprep.subr.bf16.mxu0 0
        %1449 = vmatpush1.bf16.msra.mxu0 %v1443
        %1450 = vmatprep.subr.bf16.mxu0 0
        %1451 = vmatpush1.bf16.msra.mxu0 %v1444
        %1452 = vmatprep.subr.bf16.mxu0 0
        %1453 = vmatpush1.bf16.msra.mxu0 0
        %1454 = vmatprep.subr.bf16.mxu0 0
        %1455 = vmatpush1.bf16.msra.mxu0 0
        %1456 = vmatprep.subr.bf16.mxu0 0
        %1457 = vmatpush1.bf16.msra.mxu0 0
        %1458 = vmatprep.subr.bf16.mxu0 0
        %1459 = vmatpush1.bf16.msra.mxu0 0
        %1460 = vmatprep.subr.bf16.mxu0 0
        %1461 = vmatpush1.bf16.msra.mxu0 0
        %1462 = vmatprep.subr.bf16.mxu0 0
        %1463 = vmatpush1.bf16.msra.mxu0 0
        %1464 = vmatprep.subr.bf16.mxu0 0
        %1465 = vmatpush1.bf16.msra.mxu0 0
        %1466 = vmatprep.subr.bf16.mxu0 0
        %1467 = vmatpush1.bf16.msra.mxu0 0
        %1468 = vmatprep.subr.bf16.mxu0 0
        %1469 = vmatpush1.bf16.msra.mxu0 0
        %1470 = vmatprep.subr.bf16.mxu0 0
        %1471 = vmatpush1.bf16.msra.mxu0 0
        %1472 = vmatprep.subr.bf16.mxu0 0
        %1473 = vmatpush1.bf16.msra.mxu0 0
        %1474 = vmatprep.subr.bf16.mxu0 0
        %1475 = vmatpush1.bf16.msra.mxu0 0
        %1476 = vmatprep.subr.bf16.mxu0 0
        %1477 = vmatpush1.bf16.msra.mxu0 0
        %1478 = vmatprep.subr.bf16.mxu0 0
        %1479 = vmatpush1.bf16.msra.mxu0 0
        %1480 = vmatprep.mubr.bf16.mxu0 0
        %1481 = vmatmul.mubr.bf16.gmra.mrb[0].mxu0 %v1446
        %v1482 = vpop.f32.mrb[0].mxu0
        %v1483 = vadd.f32 0.0, %v1482
        %v1484 = vpop.f32.mrb[0].mxu0
        %v1485 = vpop.f32.mrb[0].mxu0
        %v1486 = vpop.f32.mrb[0].mxu0
        %1487 = vdwg.mxu0
        %v1488 = vadd.f32 %v1298, %v1483
        %1489 = vst.msk [vmem:[%s439] sm:$0xff] %vm464, %v1488
        %s1490 = sand.u32 %s266, 1
        %s1491 = scalar_lea.sflag [#allocation4], %s1490
        %s1492 = sand.u32 %s266, 1
        %s1493 = smul.addr %s1492, 8
        %s1494 = scalar_lea.vmem [#allocation8], %s1493
        // Predicated region
        $region73: #{tpu_custom_call.1} parent=59 // pred_check
          %p1495 = pneg %p276
        $region74: #{tpu_custom_call.1} parent=59 // pred_check_branch
          %1497 = sbr.rel (%p1495) target = $region76
        $region75: #{tpu_custom_call.1} parent=59 // pred_region
          %s1499 = ssub.s32 128, 128
          %1500 = vsyncadd %s1491, %s1499
          %s1501 = smul.addr %s28, 128
          %s1502 = scalar_lea.hbm %s10, %s1501
          %s1504 = sshll.u32 %s1494, 4
          %s1505 = int_to_ptr.vmem [resolvable:$true] %s1504
          %1507 = dma.vmem_to_hbm [thread:$0]  %s1505, 128, %s1502, %s1491
        $region76: #{tpu_custom_call.1} parent=59 // pred_fallthru
          _
      $region60: #{tpu_custom_call.1} parent=5 // pred_fallthru
        _
      %p1508 = scmp.le.s32.totalorder 2, %s23
      // Predicated region
      $region77: #{tpu_custom_call.1} parent=5 // pred_check
        %p1509 = pneg %p1508
      $region78: #{tpu_custom_call.1} parent=5 // pred_check_branch
        %1511 = sbr.rel (%p1509) target = $region80
      $region79: #{tpu_custom_call.1} parent=5 // pred_region
        %s1512 = ssub.s32 %s23, 2
        // Predicated region
        $region81: #{tpu_custom_call.1} parent=79 // pred_check
          %p1513 = pneg %p282
        $region82: #{tpu_custom_call.1} parent=79 // pred_check_branch
          %1515 = sbr.rel (%p1513) target = $region84
        $region83: #{tpu_custom_call.1} parent=79 // pred_region
          %s1516 = sand.u32 %s267, 1
          %s1517 = scalar_lea.sflag [#allocation4], %s1516
          %s1518 = sand.u32 %s267, 1
          %s1519 = smul.addr %s1518, 8
          %s1520 = scalar_lea.vmem [#allocation8], %s1519
          %1521 = dma.done %s1517, 128
        $region84: #{tpu_custom_call.1} parent=79 // pred_fallthru
          _
      $region80: #{tpu_custom_call.1} parent=5 // pred_fallthru
        _
    $region6: #{tpu_custom_call.1} parent=1 // loop_footer
      %s27 = sadd.s32 1, %s23
    $region7: #{tpu_custom_call.1} parent=1 // loop_footer_branch
      %22 = sbr.rel target = $region3
    $region8: #{tpu_custom_call.1} parent=1 // loop_exit
      _
    %1522 = vsyncpa [#allocation3], 1
    %s1523 = scalar_lea.sflag [#allocation3], 1
    %1524 = vsyncpa %s1523, 1
    %1525 = vsyncpa [#allocation6], 1
    %1526 = vsyncpa [#allocation4], 1
    %s1527 = scalar_lea.sflag [#allocation4], 1
    %1528 = vsyncpa %s1527, 1

</llo_original>
